<compile_context>
chip_gen: v7x
topology: tpu7x:2x2x1
jax: 0.10.0
libtpu: 0.0.40
codegen_flags: <defaults>
</compile_context>

<pallas_src>
import math
from functools import partial

import jax
import jax.numpy as jnp
from jax import lax
from jax.experimental import pallas as pl
from jax.experimental.pallas import tpu as pltpu


def _pick_q_tile(q_len):
    for t in (512, 256, 128):
        if q_len % t == 0:
            return t
    return q_len


# --------------------------------------------------------------------------
# Fused kernel: one (batch, q-tile) step = projections + MHA + fc_out.
#   q_ref  : (q_tile, E)              compute_dtype
#   k_ref  : (k_len, E)               compute_dtype
#   v_ref  : (k_len, E)               compute_dtype
#   m_ref  : (heads, q_tile, k_len)   int8  (0 = masked out)
#   wq/wk/wv_ref : (E, E) block-diagonal [in, out]; wq pre-scaled by 1/sqrt(E)
#   wfc_ref: (E, E) [in, out]
#   bfc_ref: (1, E) f32
#   o_ref  : (q_tile, E) f32
#   ctx_ref: VMEM (q_tile, E) f32 scratch slab (per-head PV results)
# --------------------------------------------------------------------------
def _mha_fused_kernel(q_ref, k_ref, v_ref, m_ref,
                      wq_ref, wk_ref, wv_ref, wfc_ref, bfc_ref,
                      o_ref, ctx_ref, *, heads, head_dim, compute_dtype):
    cd = compute_dtype

    # Lane-dense block-diagonal projections: one MXU matmul per projection.
    qp = jnp.dot(q_ref[...], wq_ref[...], preferred_element_type=jnp.float32)  # (q_tile, E)
    kp = jnp.dot(k_ref[...], wk_ref[...], preferred_element_type=jnp.float32)  # (k_len, E)
    vp = jnp.dot(v_ref[...], wv_ref[...], preferred_element_type=jnp.float32)  # (k_len, E)

    for h in range(heads):  # static unroll; heads is small here
        lo = h * head_dim
        qh = qp[:, lo:lo + head_dim].astype(cd)   # static lane slices of the
        kh = kp[:, lo:lo + head_dim].astype(cd)   # lane-dense projected slabs
        vh = vp[:, lo:lo + head_dim].astype(cd)

        # energy[q, k] = sum_d qh[q, d] * kh[k, d]   (no explicit transpose op)
        energy = lax.dot_general(qh, kh, (((1,), (1,)), ((), ())),
                                 preferred_element_type=jnp.float32)  # (q_tile, k_len)

        # masked_fill(mask == 0, -1e20); only this head's slice is widened.
        mh = m_ref[h].astype(jnp.int32)
        energy = jnp.where(mh == 0, jnp.float32(-1e20), energy)

        # Softmax entirely in f32 (v5e VPU/EUP have no bf16 path).
        mmax = jnp.max(energy, axis=-1, keepdims=True)
        e = jnp.exp(energy - mmax)
        inv = pl.reciprocal(jnp.sum(e, axis=-1, keepdims=True), approx=True)
        attn = (e * inv).astype(cd)                                   # (q_tile, k_len)

        # Write this head's PV result into the lane slice of the scratch slab.
        ctx_ref[:, lo:lo + head_dim] = jnp.dot(
            attn, vh, preferred_element_type=jnp.float32)

    # Fused fc_out (Linear with bias); single lane-dense store.
    o_ref[...] = (jnp.dot(ctx_ref[...].astype(cd), wfc_ref[...],
                          preferred_element_type=jnp.float32)
                  + bfc_ref[...]).astype(o_ref.dtype)


# --------------------------------------------------------------------------
# Wrapper
# --------------------------------------------------------------------------
def self_attention(values, queries, keys, mask, params, embed_size, heads,
                   compute_dtype=jnp.bfloat16):
    """values/queries/keys: (N, len, heads, head_dim) f32
       mask: broadcastable to (N, heads, q_len, k_len); 0 = masked out.
       compute_dtype: MXU operand dtype (bf16 default; accumulation is f32)."""
    N, q_len, h_, head_dim = queries.shape
    assert h_ == heads and heads * head_dim == embed_size
    k_len = keys.shape[1]
    assert values.shape[1] == k_len
    E = embed_size

    # One-time weight prep: block-diagonal [in, out] weights (I_heads (x) W.T)
    # so the per-head shared Linear becomes a single lane-dense (E, E) matmul;
    # the 1/sqrt(E) softmax scale is folded into the Q projection.
    scale = 1.0 / math.sqrt(embed_size)
    eye = jnp.eye(heads, dtype=jnp.float32)
    wq_bd = jnp.kron(eye, params["wq"].T * scale).astype(compute_dtype)
    wk_bd = jnp.kron(eye, params["wk"].T).astype(compute_dtype)
    wv_bd = jnp.kron(eye, params["wv"].T).astype(compute_dtype)
    wfc_t = params["w_fc"].T.astype(compute_dtype)
    b_fc = params["b_fc"].reshape(1, E).astype(jnp.float32)

    # Merge (heads, head_dim) -> E: contiguity-preserving reshape, lane-dense.
    q_in = queries.reshape(N, q_len, E).astype(compute_dtype)
    k_in = keys.reshape(N, k_len, E).astype(compute_dtype)
    v_in = values.reshape(N, k_len, E).astype(compute_dtype)
    mask_i8 = jnp.broadcast_to(mask, (N, heads, q_len, k_len)).astype(jnp.int8)

    q_tile = _pick_q_tile(q_len)
    n_qt = q_len // q_tile
    grid = (N, n_qt)

    kernel = partial(_mha_fused_kernel, heads=heads, head_dim=head_dim,
                     compute_dtype=compute_dtype)

    elt = jnp.dtype(compute_dtype).itemsize
    # VMEM budget: double-buffered per-step inputs/outputs + resident weights
    # + scratch + in-kernel f32 temporaries, clamped to a v7x-safe 64 MiB.
    step_bytes = (q_tile * E * elt + 2 * k_len * E * elt
                  + heads * q_tile * k_len            # int8 mask
                  + q_tile * E * 4)                   # f32 output tile
    weight_bytes = 4 * E * E * elt + E * 4
    temp_bytes = (q_tile + 2 * k_len) * E * 4 + 3 * q_tile * k_len * 4
    scratch_bytes = q_tile * E * 4
    vmem_limit = int(min(max(2 * step_bytes + 2 * weight_bytes + temp_bytes
                             + scratch_bytes + (4 << 20), 16 << 20), 64 << 20))

    flops_per_step = (2 * (q_tile + 2 * k_len) * E * E       # projections
                      + 4 * heads * q_tile * k_len * head_dim  # QK^T and PV
                      + 2 * q_tile * E * E)                  # fc_out
    bytes_accessed = (q_in.size * elt + n_qt * (k_in.size + v_in.size) * elt
                      + mask_i8.size
                      + (wq_bd.size + wk_bd.size + wv_bd.size + wfc_t.size) * elt
                      + b_fc.size * 4
                      + N * q_len * E * 4)

    out = pl.pallas_call(
        kernel,
        out_shape=jax.ShapeDtypeStruct((N, q_len, E), jnp.float32),
        grid_spec=pltpu.PrefetchScalarGridSpec(
            num_scalar_prefetch=0,
            grid=grid,
            in_specs=[
                pl.BlockSpec((None, q_tile, E), lambda n, qi: (n, qi, 0)),
                pl.BlockSpec((None, k_len, E), lambda n, qi: (n, 0, 0)),
                pl.BlockSpec((None, k_len, E), lambda n, qi: (n, 0, 0)),
                pl.BlockSpec((None, heads, q_tile, k_len),
                             lambda n, qi: (n, 0, qi, 0)),
                # weights / bias: constant index maps -> resident across grid
                pl.BlockSpec((E, E), lambda n, qi: (0, 0)),
                pl.BlockSpec((E, E), lambda n, qi: (0, 0)),
                pl.BlockSpec((E, E), lambda n, qi: (0, 0)),
                pl.BlockSpec((E, E), lambda n, qi: (0, 0)),
                pl.BlockSpec((1, E), lambda n, qi: (0, 0)),
            ],
            out_specs=pl.BlockSpec((None, q_tile, E), lambda n, qi: (n, qi, 0)),
            scratch_shapes=[pltpu.VMEM((q_tile, E), jnp.float32)],
        ),
        compiler_params=pltpu.CompilerParams(
            dimension_semantics=("parallel", "parallel"),
            vmem_limit_bytes=vmem_limit),
        cost_estimate=pl.CostEstimate(
            flops=N * n_qt * flops_per_step,
            transcendentals=N * n_qt * heads * q_tile * k_len,
            bytes_accessed=bytes_accessed),
    )(q_in, k_in, v_in, mask_i8, wq_bd, wk_bd, wv_bd, wfc_t, b_fc)

    return out


# --------------------------------------------------------------------------
# Pure-JAX reference (mirrors the PyTorch forward) for a correctness check.
# --------------------------------------------------------------------------
def self_attention_ref(values, queries, keys, mask, params, embed_size, heads):
    v = jnp.einsum("nlhd,ed->nlhe", values, params["wv"])
    k = jnp.einsum("nlhd,ed->nlhe", keys, params["wk"])
    q = jnp.einsum("nqhd,ed->nqhe", queries, params["wq"])
    energy = jnp.einsum("nqhd,nkhd->nhqk", q, k)
    energy = jnp.where(mask == 0, -1e20, energy)
    attn = jax.nn.softmax(energy / math.sqrt(embed_size), axis=3)
    out = jnp.einsum("nhql,nlhd->nqhd", attn, v)
    N, q_len = queries.shape[0], queries.shape[1]
    out = out.reshape(N, q_len, heads * (embed_size // heads))
    return out @ params["w_fc"].T + params["b_fc"]


if __name__ == "__main__":
    embed_size, heads = 32, 4
    head_dim = embed_size // heads
    N, q_len, k_len = 2, 8, 8

    key = jax.random.PRNGKey(0)
    ks = jax.random.split(key, 8)

    params = {
        "wq": jax.random.normal(ks[0], (head_dim, head_dim), jnp.float32) * 0.1,
        "wk": jax.random.normal(ks[1], (head_dim, head_dim), jnp.float32) * 0.1,
        "wv": jax.random.normal(ks[2], (head_dim, head_dim), jnp.float32) * 0.1,
        "w_fc": jax.random.normal(ks[3], (embed_size, embed_size), jnp.float32) * 0.1,
        "b_fc": jax.random.normal(ks[4], (1, embed_size), jnp.float32) * 0.1,
    }

    values = jax.random.normal(ks[5], (N, k_len, heads, head_dim), jnp.float32)
    queries = jax.random.normal(ks[6], (N, q_len, heads, head_dim), jnp.float32)
    keys_in = jax.random.normal(ks[7], (N, k_len, heads, head_dim), jnp.float32)

    # binary mask (1 = keep, 0 = masked), causal, broadcast per batch/head
    tri = jnp.tril(jnp.ones((q_len, k_len), jnp.int32))
    mask = jnp.broadcast_to(tri[None, None], (N, heads, q_len, k_len))

    ref = self_attention_ref(values, queries, keys_in, mask, params,
                             embed_size, heads)

    # f32 operand path: tight check against the reference.
    out_f32 = self_attention(values, queries, keys_in, mask, params,
                             embed_size, heads, compute_dtype=jnp.float32)
    out_f32 = jax.block_until_ready(out_f32)
    assert out_f32.shape == (N, q_len, embed_size)
    assert jnp.allclose(out_f32, ref, atol=2e-3, rtol=2e-3), "f32 mismatch vs reference"

    # Default bf16 MXU-operand path (production default): looser tolerance.
    out_bf16 = self_attention(values, queries, keys_in, mask, params,
                              embed_size, heads)
    out_bf16 = jax.block_until_ready(out_bf16)
    assert out_bf16.shape == (N, q_len, embed_size)
    assert jnp.allclose(out_bf16, ref, atol=5e-2, rtol=5e-2), "bf16 mismatch vs reference"

    print("KERNEL_OK")
</pallas_src>

<mosaic_0001>
module attributes {stable_mosaic.version = 11 : i64} {
  func.func @_mha_fused_kernel(%arg0: i32, %arg1: i32, %arg2: memref<1x8x32xf32, #tpu.memory_space<vmem>>, %arg3: memref<1x8x32xf32, #tpu.memory_space<vmem>>, %arg4: memref<1x8x32xf32, #tpu.memory_space<vmem>>, %arg5: memref<1x4x8x8xi8, #tpu.memory_space<vmem>>, %arg6: memref<32x32xf32, #tpu.memory_space<vmem>>, %arg7: memref<32x32xf32, #tpu.memory_space<vmem>>, %arg8: memref<32x32xf32, #tpu.memory_space<vmem>>, %arg9: memref<32x32xf32, #tpu.memory_space<vmem>>, %arg10: memref<1x32xf32, #tpu.memory_space<vmem>>, %arg11: memref<1x8x32xf32, #tpu.memory_space<vmem>>, %arg12: memref<8x32xf32, #tpu.memory_space<vmem>>) attributes {dimension_semantics = [#tpu.dimension_semantics<parallel>, #tpu.dimension_semantics<parallel>], iteration_bounds = array<i64: 2, 1>, scalar_prefetch = 0 : i64, scratch_operands = 1 : i64, tpu.core_type = #tpu.core_type<tc>, window_params = [{transform_indices = @transform_0, window_bounds = array<i64: 1, 8, 32>}, {transform_indices = @transform_1, window_bounds = array<i64: 1, 8, 32>}, {transform_indices = @transform_2, window_bounds = array<i64: 1, 8, 32>}, {transform_indices = @transform_3, window_bounds = array<i64: 1, 4, 8, 8>}, {pipeline_mode = #tpu.pipeline_mode<synchronous>, transform_indices = @transform_4, window_bounds = array<i64: 32, 32>}, {pipeline_mode = #tpu.pipeline_mode<synchronous>, transform_indices = @transform_5, window_bounds = array<i64: 32, 32>}, {pipeline_mode = #tpu.pipeline_mode<synchronous>, transform_indices = @transform_6, window_bounds = array<i64: 32, 32>}, {pipeline_mode = #tpu.pipeline_mode<synchronous>, transform_indices = @transform_7, window_bounds = array<i64: 32, 32>}, {pipeline_mode = #tpu.pipeline_mode<synchronous>, transform_indices = @transform_8, window_bounds = array<i64: 1, 32>}, {transform_indices = @transform_9, window_bounds = array<i64: 1, 8, 32>}]} {
    %c0 = arith.constant 0 : index
    %c0_0 = arith.constant 0 : index
    %c0_1 = arith.constant 0 : index
    %0 = vector.load %arg2[%c0, %c0_0, %c0_1] : memref<1x8x32xf32, #tpu.memory_space<vmem>>, vector<1x8x32xf32>
    %1 = vector.shape_cast %0 : vector<1x8x32xf32> to vector<8x32xf32>
    %c0_2 = arith.constant 0 : index
    %c0_3 = arith.constant 0 : index
    %2 = vector.load %arg6[%c0_2, %c0_3] : memref<32x32xf32, #tpu.memory_space<vmem>>, vector<32x32xf32>
    %cst = arith.constant dense<0.000000e+00> : vector<8x32xf32>
    %3 = tpu.matmul %1, %2, %cst {dimension_numbers = #tpu.dot_dimension_numbers<[1], [0], [0], [1], [0, 0, 1, 1], [], []>} : vector<8x32xf32>, vector<32x32xf32>, vector<8x32xf32> -> vector<8x32xf32>
    %c0_4 = arith.constant 0 : index
    %c0_5 = arith.constant 0 : index
    %c0_6 = arith.constant 0 : index
    %4 = vector.load %arg3[%c0_4, %c0_5, %c0_6] : memref<1x8x32xf32, #tpu.memory_space<vmem>>, vector<1x8x32xf32>
    %5 = vector.shape_cast %4 : vector<1x8x32xf32> to vector<8x32xf32>
    %c0_7 = arith.constant 0 : index
    %c0_8 = arith.constant 0 : index
    %6 = vector.load %arg7[%c0_7, %c0_8] : memref<32x32xf32, #tpu.memory_space<vmem>>, vector<32x32xf32>
    %cst_9 = arith.constant dense<0.000000e+00> : vector<8x32xf32>
    %7 = tpu.matmul %5, %6, %cst_9 {dimension_numbers = #tpu.dot_dimension_numbers<[1], [0], [0], [1], [0, 0, 1, 1], [], []>} : vector<8x32xf32>, vector<32x32xf32>, vector<8x32xf32> -> vector<8x32xf32>
    %c0_10 = arith.constant 0 : index
    %c0_11 = arith.constant 0 : index
    %c0_12 = arith.constant 0 : index
    %8 = vector.load %arg4[%c0_10, %c0_11, %c0_12] : memref<1x8x32xf32, #tpu.memory_space<vmem>>, vector<1x8x32xf32>
    %9 = vector.shape_cast %8 : vector<1x8x32xf32> to vector<8x32xf32>
    %c0_13 = arith.constant 0 : index
    %c0_14 = arith.constant 0 : index
    %10 = vector.load %arg8[%c0_13, %c0_14] : memref<32x32xf32, #tpu.memory_space<vmem>>, vector<32x32xf32>
    %cst_15 = arith.constant dense<0.000000e+00> : vector<8x32xf32>
    %11 = tpu.matmul %9, %10, %cst_15 {dimension_numbers = #tpu.dot_dimension_numbers<[1], [0], [0], [1], [0, 0, 1, 1], [], []>} : vector<8x32xf32>, vector<32x32xf32>, vector<8x32xf32> -> vector<8x32xf32>
    %12 = vector.extract_strided_slice %3 {offsets = [0, 0], sizes = [8, 8], strides = [1, 1]} : vector<8x32xf32> to vector<8x8xf32>
    %13 = vector.extract_strided_slice %7 {offsets = [0, 0], sizes = [8, 8], strides = [1, 1]} : vector<8x32xf32> to vector<8x8xf32>
    %14 = vector.extract_strided_slice %11 {offsets = [0, 0], sizes = [8, 8], strides = [1, 1]} : vector<8x32xf32> to vector<8x8xf32>
    %cst_16 = arith.constant dense<0.000000e+00> : vector<8x8xf32>
    %15 = tpu.matmul %12, %13, %cst_16 {dimension_numbers = #tpu.dot_dimension_numbers<[1], [1], [0], [0], [0, 0, 1, 0], [], []>} : vector<8x8xf32>, vector<8x8xf32>, vector<8x8xf32> -> vector<8x8xf32>
    %c0_17 = arith.constant 0 : index
    %c0_18 = arith.constant 0 : index
    %c0_19 = arith.constant 0 : index
    %c0_20 = arith.constant 0 : index
    %16 = vector.load %arg5[%c0_17, %c0_18, %c0_19, %c0_20] : memref<1x4x8x8xi8, #tpu.memory_space<vmem>>, vector<1x1x8x8xi8>
    %17 = vector.shape_cast %16 : vector<1x1x8x8xi8> to vector<8x8xi8>
    %18 = arith.extsi %17 : vector<8x8xi8> to vector<8x8xi32>
    %c0_i32 = arith.constant 0 : i32
    %19 = vector.broadcast %c0_i32 : i32 to vector<8x8xi32>
    %20 = arith.cmpi eq, %18, %19 : vector<8x8xi32>
    %cst_21 = arith.constant -1.000000e+20 : f32
    %21 = vector.broadcast %cst_21 : f32 to vector<8x8xf32>
    %22 = arith.select %20, %21, %15 : vector<8x8xi1>, vector<8x8xf32>
    %cst_22 = arith.constant dense<0xFF800000> : vector<8xf32>
    %23 = vector.multi_reduction <maximumf>, %22, %cst_22 [1] : vector<8x8xf32> to vector<8xf32>
    %24 = vector.shape_cast %23 : vector<8xf32> to vector<8x1xf32>
    %25 = vector.broadcast %24 : vector<8x1xf32> to vector<8x8xf32>
    %26 = arith.subf %22, %25 : vector<8x8xf32>
    %27 = math.exp %26 : vector<8x8xf32>
    %cst_23 = arith.constant dense<0.000000e+00> : vector<8xf32>
    %28 = vector.multi_reduction <add>, %27, %cst_23 [1] : vector<8x8xf32> to vector<8xf32>
    %29 = vector.shape_cast %28 : vector<8xf32> to vector<8x1xf32>
    %30 = tpu.reciprocal %29 {approx = true} : vector<8x1xf32> -> vector<8x1xf32>
    %31 = vector.broadcast %30 : vector<8x1xf32> to vector<8x8xf32>
    %32 = arith.mulf %27, %31 : vector<8x8xf32>
    %cst_24 = arith.constant dense<0.000000e+00> : vector<8x8xf32>
    %33 = tpu.matmul %32, %14, %cst_24 {dimension_numbers = #tpu.dot_dimension_numbers<[1], [0], [0], [1], [0, 0, 1, 1], [], []>} : vector<8x8xf32>, vector<8x8xf32>, vector<8x8xf32> -> vector<8x8xf32>
    %c0_25 = arith.constant 0 : index
    %c0_26 = arith.constant 0 : index
    %34 = vector.load %arg12[%c0_25, %c0_26] : memref<8x32xf32, #tpu.memory_space<vmem>>, vector<8x8xf32>
    tpu.vector_store %arg12[%c0_25, %c0_26], %33 {strides = array<i32>} : memref<8x32xf32, #tpu.memory_space<vmem>>, vector<8x8xf32>,
    %35 = vector.extract_strided_slice %3 {offsets = [0, 8], sizes = [8, 8], strides = [1, 1]} : vector<8x32xf32> to vector<8x8xf32>
    %36 = vector.extract_strided_slice %7 {offsets = [0, 8], sizes = [8, 8], strides = [1, 1]} : vector<8x32xf32> to vector<8x8xf32>
    %37 = vector.extract_strided_slice %11 {offsets = [0, 8], sizes = [8, 8], strides = [1, 1]} : vector<8x32xf32> to vector<8x8xf32>
    %cst_27 = arith.constant dense<0.000000e+00> : vector<8x8xf32>
    %38 = tpu.matmul %35, %36, %cst_27 {dimension_numbers = #tpu.dot_dimension_numbers<[1], [1], [0], [0], [0, 0, 1, 0], [], []>} : vector<8x8xf32>, vector<8x8xf32>, vector<8x8xf32> -> vector<8x8xf32>
    %c0_28 = arith.constant 0 : index
    %c1 = arith.constant 1 : index
    %c0_29 = arith.constant 0 : index
    %c0_30 = arith.constant 0 : index
    %39 = vector.load %arg5[%c0_28, %c1, %c0_29, %c0_30] : memref<1x4x8x8xi8, #tpu.memory_space<vmem>>, vector<1x1x8x8xi8>
    %40 = vector.shape_cast %39 : vector<1x1x8x8xi8> to vector<8x8xi8>
    %41 = arith.extsi %40 : vector<8x8xi8> to vector<8x8xi32>
    %c0_i32_31 = arith.constant 0 : i32
    %42 = vector.broadcast %c0_i32_31 : i32 to vector<8x8xi32>
    %43 = arith.cmpi eq, %41, %42 : vector<8x8xi32>
    %cst_32 = arith.constant -1.000000e+20 : f32
    %44 = vector.broadcast %cst_32 : f32 to vector<8x8xf32>
    %45 = arith.select %43, %44, %38 : vector<8x8xi1>, vector<8x8xf32>
    %cst_33 = arith.constant dense<0xFF800000> : vector<8xf32>
    %46 = vector.multi_reduction <maximumf>, %45, %cst_33 [1] : vector<8x8xf32> to vector<8xf32>
    %47 = vector.shape_cast %46 : vector<8xf32> to vector<8x1xf32>
    %48 = vector.broadcast %47 : vector<8x1xf32> to vector<8x8xf32>
    %49 = arith.subf %45, %48 : vector<8x8xf32>
    %50 = math.exp %49 : vector<8x8xf32>
    %cst_34 = arith.constant dense<0.000000e+00> : vector<8xf32>
    %51 = vector.multi_reduction <add>, %50, %cst_34 [1] : vector<8x8xf32> to vector<8xf32>
    %52 = vector.shape_cast %51 : vector<8xf32> to vector<8x1xf32>
    %53 = tpu.reciprocal %52 {approx = true} : vector<8x1xf32> -> vector<8x1xf32>
    %54 = vector.broadcast %53 : vector<8x1xf32> to vector<8x8xf32>
    %55 = arith.mulf %50, %54 : vector<8x8xf32>
    %cst_35 = arith.constant dense<0.000000e+00> : vector<8x8xf32>
    %56 = tpu.matmul %55, %37, %cst_35 {dimension_numbers = #tpu.dot_dimension_numbers<[1], [0], [0], [1], [0, 0, 1, 1], [], []>} : vector<8x8xf32>, vector<8x8xf32>, vector<8x8xf32> -> vector<8x8xf32>
    %c0_36 = arith.constant 0 : index
    %c8 = arith.constant 8 : index
    %57 = vector.load %arg12[%c0_36, %c8] : memref<8x32xf32, #tpu.memory_space<vmem>>, vector<8x8xf32>
    tpu.vector_store %arg12[%c0_36, %c8], %56 {strides = array<i32>} : memref<8x32xf32, #tpu.memory_space<vmem>>, vector<8x8xf32>,
    %58 = vector.extract_strided_slice %3 {offsets = [0, 16], sizes = [8, 8], strides = [1, 1]} : vector<8x32xf32> to vector<8x8xf32>
    %59 = vector.extract_strided_slice %7 {offsets = [0, 16], sizes = [8, 8], strides = [1, 1]} : vector<8x32xf32> to vector<8x8xf32>
    %60 = vector.extract_strided_slice %11 {offsets = [0, 16], sizes = [8, 8], strides = [1, 1]} : vector<8x32xf32> to vector<8x8xf32>
    %cst_37 = arith.constant dense<0.000000e+00> : vector<8x8xf32>
    %61 = tpu.matmul %58, %59, %cst_37 {dimension_numbers = #tpu.dot_dimension_numbers<[1], [1], [0], [0], [0, 0, 1, 0], [], []>} : vector<8x8xf32>, vector<8x8xf32>, vector<8x8xf32> -> vector<8x8xf32>
    %c0_38 = arith.constant 0 : index
    %c2 = arith.constant 2 : index
    %c0_39 = arith.constant 0 : index
    %c0_40 = arith.constant 0 : index
    %62 = vector.load %arg5[%c0_38, %c2, %c0_39, %c0_40] : memref<1x4x8x8xi8, #tpu.memory_space<vmem>>, vector<1x1x8x8xi8>
    %63 = vector.shape_cast %62 : vector<1x1x8x8xi8> to vector<8x8xi8>
    %64 = arith.extsi %63 : vector<8x8xi8> to vector<8x8xi32>
    %c0_i32_41 = arith.constant 0 : i32
    %65 = vector.broadcast %c0_i32_41 : i32 to vector<8x8xi32>
    %66 = arith.cmpi eq, %64, %65 : vector<8x8xi32>
    %cst_42 = arith.constant -1.000000e+20 : f32
    %67 = vector.broadcast %cst_42 : f32 to vector<8x8xf32>
    %68 = arith.select %66, %67, %61 : vector<8x8xi1>, vector<8x8xf32>
    %cst_43 = arith.constant dense<0xFF800000> : vector<8xf32>
    %69 = vector.multi_reduction <maximumf>, %68, %cst_43 [1] : vector<8x8xf32> to vector<8xf32>
    %70 = vector.shape_cast %69 : vector<8xf32> to vector<8x1xf32>
    %71 = vector.broadcast %70 : vector<8x1xf32> to vector<8x8xf32>
    %72 = arith.subf %68, %71 : vector<8x8xf32>
    %73 = math.exp %72 : vector<8x8xf32>
    %cst_44 = arith.constant dense<0.000000e+00> : vector<8xf32>
    %74 = vector.multi_reduction <add>, %73, %cst_44 [1] : vector<8x8xf32> to vector<8xf32>
    %75 = vector.shape_cast %74 : vector<8xf32> to vector<8x1xf32>
    %76 = tpu.reciprocal %75 {approx = true} : vector<8x1xf32> -> vector<8x1xf32>
    %77 = vector.broadcast %76 : vector<8x1xf32> to vector<8x8xf32>
    %78 = arith.mulf %73, %77 : vector<8x8xf32>
    %cst_45 = arith.constant dense<0.000000e+00> : vector<8x8xf32>
    %79 = tpu.matmul %78, %60, %cst_45 {dimension_numbers = #tpu.dot_dimension_numbers<[1], [0], [0], [1], [0, 0, 1, 1], [], []>} : vector<8x8xf32>, vector<8x8xf32>, vector<8x8xf32> -> vector<8x8xf32>
    %c0_46 = arith.constant 0 : index
    %c16 = arith.constant 16 : index
    %80 = vector.load %arg12[%c0_46, %c16] : memref<8x32xf32, #tpu.memory_space<vmem>>, vector<8x8xf32>
    tpu.vector_store %arg12[%c0_46, %c16], %79 {strides = array<i32>} : memref<8x32xf32, #tpu.memory_space<vmem>>, vector<8x8xf32>,
    %81 = vector.extract_strided_slice %3 {offsets = [0, 24], sizes = [8, 8], strides = [1, 1]} : vector<8x32xf32> to vector<8x8xf32>
    %82 = vector.extract_strided_slice %7 {offsets = [0, 24], sizes = [8, 8], strides = [1, 1]} : vector<8x32xf32> to vector<8x8xf32>
    %83 = vector.extract_strided_slice %11 {offsets = [0, 24], sizes = [8, 8], strides = [1, 1]} : vector<8x32xf32> to vector<8x8xf32>
    %cst_47 = arith.constant dense<0.000000e+00> : vector<8x8xf32>
    %84 = tpu.matmul %81, %82, %cst_47 {dimension_numbers = #tpu.dot_dimension_numbers<[1], [1], [0], [0], [0, 0, 1, 0], [], []>} : vector<8x8xf32>, vector<8x8xf32>, vector<8x8xf32> -> vector<8x8xf32>
    %c0_48 = arith.constant 0 : index
    %c3 = arith.constant 3 : index
    %c0_49 = arith.constant 0 : index
    %c0_50 = arith.constant 0 : index
    %85 = vector.load %arg5[%c0_48, %c3, %c0_49, %c0_50] : memref<1x4x8x8xi8, #tpu.memory_space<vmem>>, vector<1x1x8x8xi8>
    %86 = vector.shape_cast %85 : vector<1x1x8x8xi8> to vector<8x8xi8>
    %87 = arith.extsi %86 : vector<8x8xi8> to vector<8x8xi32>
    %c0_i32_51 = arith.constant 0 : i32
    %88 = vector.broadcast %c0_i32_51 : i32 to vector<8x8xi32>
    %89 = arith.cmpi eq, %87, %88 : vector<8x8xi32>
    %cst_52 = arith.constant -1.000000e+20 : f32
    %90 = vector.broadcast %cst_52 : f32 to vector<8x8xf32>
    %91 = arith.select %89, %90, %84 : vector<8x8xi1>, vector<8x8xf32>
    %cst_53 = arith.constant dense<0xFF800000> : vector<8xf32>
    %92 = vector.multi_reduction <maximumf>, %91, %cst_53 [1] : vector<8x8xf32> to vector<8xf32>
    %93 = vector.shape_cast %92 : vector<8xf32> to vector<8x1xf32>
    %94 = vector.broadcast %93 : vector<8x1xf32> to vector<8x8xf32>
    %95 = arith.subf %91, %94 : vector<8x8xf32>
    %96 = math.exp %95 : vector<8x8xf32>
    %cst_54 = arith.constant dense<0.000000e+00> : vector<8xf32>
    %97 = vector.multi_reduction <add>, %96, %cst_54 [1] : vector<8x8xf32> to vector<8xf32>
    %98 = vector.shape_cast %97 : vector<8xf32> to vector<8x1xf32>
    %99 = tpu.reciprocal %98 {approx = true} : vector<8x1xf32> -> vector<8x1xf32>
    %100 = vector.broadcast %99 : vector<8x1xf32> to vector<8x8xf32>
    %101 = arith.mulf %96, %100 : vector<8x8xf32>
    %cst_55 = arith.constant dense<0.000000e+00> : vector<8x8xf32>
    %102 = tpu.matmul %101, %83, %cst_55 {dimension_numbers = #tpu.dot_dimension_numbers<[1], [0], [0], [1], [0, 0, 1, 1], [], []>} : vector<8x8xf32>, vector<8x8xf32>, vector<8x8xf32> -> vector<8x8xf32>
    %c0_56 = arith.constant 0 : index
    %c24 = arith.constant 24 : index
    %103 = vector.load %arg12[%c0_56, %c24] : memref<8x32xf32, #tpu.memory_space<vmem>>, vector<8x8xf32>
    tpu.vector_store %arg12[%c0_56, %c24], %102 {strides = array<i32>} : memref<8x32xf32, #tpu.memory_space<vmem>>, vector<8x8xf32>,
    %c0_57 = arith.constant 0 : index
    %c0_58 = arith.constant 0 : index
    %104 = vector.load %arg12[%c0_57, %c0_58] : memref<8x32xf32, #tpu.memory_space<vmem>>, vector<8x32xf32>
    %c0_59 = arith.constant 0 : index
    %c0_60 = arith.constant 0 : index
    %105 = vector.load %arg9[%c0_59, %c0_60] : memref<32x32xf32, #tpu.memory_space<vmem>>, vector<32x32xf32>
    %cst_61 = arith.constant dense<0.000000e+00> : vector<8x32xf32>
    %106 = tpu.matmul %104, %105, %cst_61 {dimension_numbers = #tpu.dot_dimension_numbers<[1], [0], [0], [1], [0, 0, 1, 1], [], []>} : vector<8x32xf32>, vector<32x32xf32>, vector<8x32xf32> -> vector<8x32xf32>
    %c0_62 = arith.constant 0 : index
    %c0_63 = arith.constant 0 : index
    %107 = vector.load %arg10[%c0_62, %c0_63] : memref<1x32xf32, #tpu.memory_space<vmem>>, vector<1x32xf32>
    %108 = vector.broadcast %107 : vector<1x32xf32> to vector<8x32xf32>
    %109 = arith.addf %106, %108 : vector<8x32xf32>
    %c0_64 = arith.constant 0 : index
    %c0_65 = arith.constant 0 : index
    %c0_66 = arith.constant 0 : index
    %110 = vector.load %arg11[%c0_64, %c0_65, %c0_66] : memref<1x8x32xf32, #tpu.memory_space<vmem>>, vector<1x8x32xf32>
    %111 = vector.shape_cast %110 : vector<1x8x32xf32> to vector<8x32xf32>
    %112 = vector.shape_cast %109 : vector<8x32xf32> to vector<1x8x32xf32>
    tpu.vector_store %arg11[%c0_64, %c0_65, %c0_66], %112 {strides = array<i32>} : memref<1x8x32xf32, #tpu.memory_space<vmem>>, vector<1x8x32xf32>,
    return
  }
  func.func @transform_0(%arg0: i32, %arg1: i32) -> (i32, i32, i32) {
    %c0_i32 = arith.constant 0 : i32
    %c0_i32_0 = arith.constant 0 : i32
    return %arg0, %arg1, %c0_i32 : i32, i32, i32
  }
  func.func @transform_1(%arg0: i32, %arg1: i32) -> (i32, i32, i32) {
    %c0_i32 = arith.constant 0 : i32
    %c0_i32_0 = arith.constant 0 : i32
    %c0_i32_1 = arith.constant 0 : i32
    return %arg0, %c0_i32, %c0_i32_0 : i32, i32, i32
  }
  func.func @transform_2(%arg0: i32, %arg1: i32) -> (i32, i32, i32) {
    %c0_i32 = arith.constant 0 : i32
    %c0_i32_0 = arith.constant 0 : i32
    %c0_i32_1 = arith.constant 0 : i32
    return %arg0, %c0_i32, %c0_i32_0 : i32, i32, i32
  }
  func.func @transform_3(%arg0: i32, %arg1: i32) -> (i32, i32, i32, i32) {
    %c0_i32 = arith.constant 0 : i32
    %c0_i32_0 = arith.constant 0 : i32
    %c0_i32_1 = arith.constant 0 : i32
    return %arg0, %c0_i32, %arg1, %c0_i32_0 : i32, i32, i32, i32
  }
  func.func @transform_4(%arg0: i32, %arg1: i32) -> (i32, i32) {
    %c0_i32 = arith.constant 0 : i32
    %c0_i32_0 = arith.constant 0 : i32
    %c0_i32_1 = arith.constant 0 : i32
    return %c0_i32, %c0_i32_0 : i32, i32
  }
  func.func @transform_5(%arg0: i32, %arg1: i32) -> (i32, i32) {
    %c0_i32 = arith.constant 0 : i32
    %c0_i32_0 = arith.constant 0 : i32
    %c0_i32_1 = arith.constant 0 : i32
    return %c0_i32, %c0_i32_0 : i32, i32
  }
  func.func @transform_6(%arg0: i32, %arg1: i32) -> (i32, i32) {
    %c0_i32 = arith.constant 0 : i32
    %c0_i32_0 = arith.constant 0 : i32
    %c0_i32_1 = arith.constant 0 : i32
    return %c0_i32, %c0_i32_0 : i32, i32
  }
  func.func @transform_7(%arg0: i32, %arg1: i32) -> (i32, i32) {
    %c0_i32 = arith.constant 0 : i32
    %c0_i32_0 = arith.constant 0 : i32
    %c0_i32_1 = arith.constant 0 : i32
    return %c0_i32, %c0_i32_0 : i32, i32
  }
  func.func @transform_8(%arg0: i32, %arg1: i32) -> (i32, i32) {
    %c0_i32 = arith.constant 0 : i32
    %c0_i32_0 = arith.constant 0 : i32
    %c0_i32_1 = arith.constant 0 : i32
    return %c0_i32, %c0_i32_0 : i32, i32
  }
  func.func @transform_9(%arg0: i32, %arg1: i32) -> (i32, i32, i32) {
    %c0_i32 = arith.constant 0 : i32
    %c0_i32_0 = arith.constant 0 : i32
    return %arg0, %arg1, %c0_i32 : i32, i32, i32
  }
}

</mosaic_0001>

<llo_original>
// kernel: tpu_custom_call.1
$region0: #{tpu_custom_call.1}
  #allocation0 [shape = 'u32[]', space=smem, size = 0x4, offset = 0x4, fixed_abs, tag = 'smem constant byte address 0x4 - core index']
  #allocation1 [shape = 'u32[144,128]{1,0:T(1,128)}', space=vmem, size = 0x12000, scoped, tag = 'internal scratch']
  #allocation2 [shape = 'f32[8,32]{1,0:T(8,128)}', space=vmem, size = 0x1000, scoped, tag = 'scratch operand']
  %s0 = inlined_call_operand.hbm [shape: f32[2,8,32], index: 0, kind: input, shape index: {}]
  %s1 = inlined_call_operand.hbm [shape: f32[2,8,32], index: 1, kind: input, shape index: {}]
  %s2 = inlined_call_operand.hbm [shape: f32[2,8,32], index: 2, kind: input, shape index: {}]
  %s3 = inlined_call_operand.hbm [shape: s8[2,4,8,8], index: 3, kind: input, shape index: {}]
  %s4 = inlined_call_operand.hbm [shape: f32[32,32], index: 4, kind: input, shape index: {}]
  %s5 = inlined_call_operand.hbm [shape: f32[32,32], index: 5, kind: input, shape index: {}]
  %s6 = inlined_call_operand.hbm [shape: f32[32,32], index: 6, kind: input, shape index: {}]
  %s7 = inlined_call_operand.hbm [shape: f32[32,32], index: 7, kind: input, shape index: {}]
  %s8 = inlined_call_operand.vmem [shape: f32[1,32], index: 8, kind: input, shape index: {}]
  %s9 = inlined_call_operand.hbm [shape: f32[2,8,32], index: 9, kind: output, shape index: {}]
  %s10 = sld [smem:[#allocation0]]
  $region101: #{tpu_custom_call.1} parent=0
    _
  %s12 = ssub.s32 1, %s10
  %s13 = scalar_select 0, %s12, %s10
  $region1: #{tpu_custom_call.1} parent=0
    #allocation3 [shape = 'u8[8192]{0}', space=vmem, size = 0x2000, scoped, tag = 'input window, operand 0']
    #allocation4 [shape = 's32[2]{0}', space=sflag, size = 0x8, scoped, tag = 'scoped memory for tpu_custom_call.1']
    #allocation5 [shape = 's32[2]{0}', space=sflag, size = 0x8, scoped, tag = 'scoped memory for tpu_custom_call.1']
    #allocation6 [shape = 'u8[8192]{0}', space=vmem, size = 0x2000, scoped, tag = 'input window, operand 1']
    #allocation7 [shape = 's32[2]{0}', space=sflag, size = 0x8, scoped, tag = 'scoped memory for tpu_custom_call.1']
    #allocation8 [shape = 'u8[8192]{0}', space=vmem, size = 0x2000, scoped, tag = 'input window, operand 2']
    #allocation9 [shape = 'u8[8192]{0}', space=vmem, size = 0x2000, scoped, tag = 'input window, operand 3']
    #allocation10 [shape = 's32[2]{0}', space=sflag, size = 0x8, scoped, tag = 'scoped memory for tpu_custom_call.1']
    #allocation11 [shape = 'u8[16384]{0}', space=vmem, size = 0x4000, scoped, tag = 'input window, operand 4, single buffered']
    #allocation12 [shape = 'u8[16384]{0}', space=vmem, size = 0x4000, scoped, tag = 'input window, operand 5, single buffered']
    #allocation13 [shape = 's32[1]{0}', space=sflag, size = 0x4, scoped, tag = 'scoped memory for tpu_custom_call.1']
    #allocation14 [shape = 'u8[16384]{0}', space=vmem, size = 0x4000, scoped, tag = 'input window, operand 6, single buffered']
    #allocation15 [shape = 'u8[16384]{0}', space=vmem, size = 0x4000, scoped, tag = 'input window, operand 7, single buffered']
    #allocation16 [shape = 's32[1]{0}', space=sflag, size = 0x4, scoped, tag = 'scoped memory for tpu_custom_call.1']
    #allocation17 [shape = 'u8[8192]{0}', space=vmem, size = 0x2000, scoped, tag = 'output window, operand 0']
    %14 = vsyncpa [#allocation4], 0
    %s15 = scalar_lea.sflag [#allocation4], 1
    %16 = vsyncpa %s15, 0
    %17 = vsyncpa [#allocation7], 0
    %s18 = scalar_lea.sflag [#allocation7], 1
    %19 = vsyncpa %s18, 0
    %20 = vsyncpa [#allocation10], 0
    %s21 = scalar_lea.sflag [#allocation10], 1
    %22 = vsyncpa %s21, 0
    %23 = vsyncpa [#allocation13], 0
    %24 = vsyncpa [#allocation16], 0
    %25 = vsyncpa [#allocation5], 0
    %s26 = scalar_lea.sflag [#allocation5], 1
    %27 = vsyncpa %s26, 0
    loop: start=0, step=1, limit=4
    $region2: #{tpu_custom_call.1} parent=1 // loop_pre_header
      _
    $region3: #{tpu_custom_call.1} parent=1 // loop_header
      %s29 = sphi 0, %s33
      %p30 = scmp.ge.s32.totalorder %s29, 4
      %s36 = sphi 0, %s48
      %s37 = sphi 0, %s44
      %s38 = sphi 0, %s36
      %s39 = sphi 0, %s37
      %s40 = sphi 0, %s38
      %s41 = sphi 0, %s39
      %s53 = sphi 0, %s55
      %s56 = sphi 0, %s53
      %s57 = sphi 0, %s56
      %s73 = sphi 0, %s57
      %s79 = sphi 0, %s81
      %s82 = sphi 0, %s79
      %s83 = sphi 0, %s82
      %s99 = sphi 0, %s83
      %s105 = sphi 0, %s107
      %s108 = sphi 0, %s105
      %s109 = sphi 0, %s108
      %s125 = sphi 0, %s109
      %s133 = sphi 0, %s135
      %s136 = sphi 0, %s133
      %s137 = sphi 0, %s136
      %s153 = sphi 0, %s137
      %s157 = sphi 0, %s157
      %s159 = sphi 0, %s157
      %s160 = sphi 0, %s159
      %s174 = sphi 0, %s160
      %s178 = sphi 0, %s178
      %s180 = sphi 0, %s178
      %s181 = sphi 0, %s180
      %s195 = sphi 0, %s181
      %s199 = sphi 0, %s199
      %s201 = sphi 0, %s199
      %s202 = sphi 0, %s201
      %s216 = sphi 0, %s202
      %s220 = sphi 0, %s220
      %s222 = sphi 0, %s220
      %s223 = sphi 0, %s222
      %s237 = sphi 0, %s223
      %s241 = sphi 0, %s241
      %s243 = sphi 0, %s241
      %s244 = sphi 0, %s243
      %s258 = sphi 0, %s244
      %s266 = sphi 0, %s268
      %s269 = sphi 0, %s266
      %s270 = sphi 0, %s269
      %s286 = sphi 0, %s270
    $region4: #{tpu_custom_call.1} parent=1 // loop_header_branch
      %32 = sbr.rel (%p30) target = $region8
    $region5: #{tpu_custom_call.1} parent=1 // loop_body
      %s34 = ssub.s32 %s29, 1
      %s35 = ssub.s32 %s29, 2
      %s42 = sadd.s32 1, %s37
      %p43 = scmp.ge.s32.totalorder %s42, 1
      %s44 = scalar_select %p43, 0, %s42
      %s45 = sadd.s32 1, %s36
      %s46 = scalar_select %p43, %s45, %s36
      %p47 = scmp.ge.s32.totalorder %s46, 2
      %s48 = scalar_select %p47, 0, %s46
      %s49 = ssub.s32 %s36, %s48
      %s50 = ssub.s32 %s37, %s44
      %s51 = sor.u32 %s49, %s50
      %p52 = scmp.eq.s32.totalorder %s51, 0
      %s54 = sadd.s32 %s53, 1
      %s55 = scalar_select %p52, %s53, %s54
      %p58 = pneg %p52
      %p59 = scmp.eq.s32.totalorder %s29, 1
      %p60 = por %p58, %p59
      %p61 = scmp.ne.s32.totalorder %s53, %s56
      %p62 = scmp.eq.s32.totalorder %s29, 0
      %p63 = por %p61, %p62
      %p64 = scmp.ne.s32.totalorder %s53, %s56
      %p65 = scmp.eq.s32.totalorder %s34, 1
      %p66 = por %p64, %p65
      %p67 = scmp.ne.s32.totalorder %s56, %s57
      %p68 = scmp.eq.s32.totalorder %s34, 0
      %p69 = por %p67, %p68
      %p70 = scmp.ne.s32.totalorder %s56, %s57
      %p71 = scmp.eq.s32.totalorder %s35, 1
      %p72 = por %p70, %p71
      %p74 = scmp.ne.s32.totalorder %s57, %s73
      %p75 = scmp.eq.s32.totalorder %s35, 0
      %p76 = por %p74, %p75
      %s77 = ssub.s32 %s36, %s48
      %p78 = scmp.eq.s32.totalorder %s77, 0
      %s80 = sadd.s32 %s79, 1
      %s81 = scalar_select %p78, %s79, %s80
      %p84 = pneg %p78
      %p85 = scmp.eq.s32.totalorder %s29, 1
      %p86 = por %p84, %p85
      %p87 = scmp.ne.s32.totalorder %s79, %s82
      %p88 = scmp.eq.s32.totalorder %s29, 0
      %p89 = por %p87, %p88
      %p90 = scmp.ne.s32.totalorder %s79, %s82
      %p91 = scmp.eq.s32.totalorder %s34, 1
      %p92 = por %p90, %p91
      %p93 = scmp.ne.s32.totalorder %s82, %s83
      %p94 = scmp.eq.s32.totalorder %s34, 0
      %p95 = por %p93, %p94
      %p96 = scmp.ne.s32.totalorder %s82, %s83
      %p97 = scmp.eq.s32.totalorder %s35, 1
      %p98 = por %p96, %p97
      %p100 = scmp.ne.s32.totalorder %s83, %s99
      %p101 = scmp.eq.s32.totalorder %s35, 0
      %p102 = por %p100, %p101
      %s103 = ssub.s32 %s36, %s48
      %p104 = scmp.eq.s32.totalorder %s103, 0
      %s106 = sadd.s32 %s105, 1
      %s107 = scalar_select %p104, %s105, %s106
      %p110 = pneg %p104
      %p111 = scmp.eq.s32.totalorder %s29, 1
      %p112 = por %p110, %p111
      %p113 = scmp.ne.s32.totalorder %s105, %s108
      %p114 = scmp.eq.s32.totalorder %s29, 0
      %p115 = por %p113, %p114
      %p116 = scmp.ne.s32.totalorder %s105, %s108
      %p117 = scmp.eq.s32.totalorder %s34, 1
      %p118 = por %p116, %p117
      %p119 = scmp.ne.s32.totalorder %s108, %s109
      %p120 = scmp.eq.s32.totalorder %s34, 0
      %p121 = por %p119, %p120
      %p122 = scmp.ne.s32.totalorder %s108, %s109
      %p123 = scmp.eq.s32.totalorder %s35, 1
      %p124 = por %p122, %p123
      %p126 = scmp.ne.s32.totalorder %s109, %s125
      %p127 = scmp.eq.s32.totalorder %s35, 0
      %p128 = por %p126, %p127
      %s129 = ssub.s32 %s36, %s48
      %s130 = ssub.s32 %s37, %s44
      %s131 = sor.u32 %s129, %s130
      %p132 = scmp.eq.s32.totalorder %s131, 0
      %s134 = sadd.s32 %s133, 1
      %s135 = scalar_select %p132, %s133, %s134
      %p138 = pneg %p132
      %p139 = scmp.eq.s32.totalorder %s29, 1
      %p140 = por %p138, %p139
      %p141 = scmp.ne.s32.totalorder %s133, %s136
      %p142 = scmp.eq.s32.totalorder %s29, 0
      %p143 = por %p141, %p142
      %p144 = scmp.ne.s32.totalorder %s133, %s136
      %p145 = scmp.eq.s32.totalorder %s34, 1
      %p146 = por %p144, %p145
      %p147 = scmp.ne.s32.totalorder %s136, %s137
      %p148 = scmp.eq.s32.totalorder %s34, 0
      %p149 = por %p147, %p148
      %p150 = scmp.ne.s32.totalorder %s136, %s137
      %p151 = scmp.eq.s32.totalorder %s35, 1
      %p152 = por %p150, %p151
      %p154 = scmp.ne.s32.totalorder %s137, %s153
      %p155 = scmp.eq.s32.totalorder %s35, 0
      %p156 = por %p154, %p155
      %s158 = sadd.s32 %s157, 1
      %p161 = scmp.eq.s32.totalorder %s29, 1
      %p162 = scmp.ne.s32.totalorder %s157, %s159
      %p163 = scmp.eq.s32.totalorder %s29, 0
      %p164 = por %p162, %p163
      %p165 = scmp.ne.s32.totalorder %s157, %s159
      %p166 = scmp.eq.s32.totalorder %s34, 1
      %p167 = por %p165, %p166
      %p168 = scmp.ne.s32.totalorder %s159, %s160
      %p169 = scmp.eq.s32.totalorder %s34, 0
      %p170 = por %p168, %p169
      %p171 = scmp.ne.s32.totalorder %s159, %s160
      %p172 = scmp.eq.s32.totalorder %s35, 1
      %p173 = por %p171, %p172
      %p175 = scmp.ne.s32.totalorder %s160, %s174
      %p176 = scmp.eq.s32.totalorder %s35, 0
      %p177 = por %p175, %p176
      %s179 = sadd.s32 %s178, 1
      %p182 = scmp.eq.s32.totalorder %s29, 1
      %p183 = scmp.ne.s32.totalorder %s178, %s180
      %p184 = scmp.eq.s32.totalorder %s29, 0
      %p185 = por %p183, %p184
      %p186 = scmp.ne.s32.totalorder %s178, %s180
      %p187 = scmp.eq.s32.totalorder %s34, 1
      %p188 = por %p186, %p187
      %p189 = scmp.ne.s32.totalorder %s180, %s181
      %p190 = scmp.eq.s32.totalorder %s34, 0
      %p191 = por %p189, %p190
      %p192 = scmp.ne.s32.totalorder %s180, %s181
      %p193 = scmp.eq.s32.totalorder %s35, 1
      %p194 = por %p192, %p193
      %p196 = scmp.ne.s32.totalorder %s181, %s195
      %p197 = scmp.eq.s32.totalorder %s35, 0
      %p198 = por %p196, %p197
      %s200 = sadd.s32 %s199, 1
      %p203 = scmp.eq.s32.totalorder %s29, 1
      %p204 = scmp.ne.s32.totalorder %s199, %s201
      %p205 = scmp.eq.s32.totalorder %s29, 0
      %p206 = por %p204, %p205
      %p207 = scmp.ne.s32.totalorder %s199, %s201
      %p208 = scmp.eq.s32.totalorder %s34, 1
      %p209 = por %p207, %p208
      %p210 = scmp.ne.s32.totalorder %s201, %s202
      %p211 = scmp.eq.s32.totalorder %s34, 0
      %p212 = por %p210, %p211
      %p213 = scmp.ne.s32.totalorder %s201, %s202
      %p214 = scmp.eq.s32.totalorder %s35, 1
      %p215 = por %p213, %p214
      %p217 = scmp.ne.s32.totalorder %s202, %s216
      %p218 = scmp.eq.s32.totalorder %s35, 0
      %p219 = por %p217, %p218
      %s221 = sadd.s32 %s220, 1
      %p224 = scmp.eq.s32.totalorder %s29, 1
      %p225 = scmp.ne.s32.totalorder %s220, %s222
      %p226 = scmp.eq.s32.totalorder %s29, 0
      %p227 = por %p225, %p226
      %p228 = scmp.ne.s32.totalorder %s220, %s222
      %p229 = scmp.eq.s32.totalorder %s34, 1
      %p230 = por %p228, %p229
      %p231 = scmp.ne.s32.totalorder %s222, %s223
      %p232 = scmp.eq.s32.totalorder %s34, 0
      %p233 = por %p231, %p232
      %p234 = scmp.ne.s32.totalorder %s222, %s223
      %p235 = scmp.eq.s32.totalorder %s35, 1
      %p236 = por %p234, %p235
      %p238 = scmp.ne.s32.totalorder %s223, %s237
      %p239 = scmp.eq.s32.totalorder %s35, 0
      %p240 = por %p238, %p239
      %s242 = sadd.s32 %s241, 1
      %p245 = scmp.eq.s32.totalorder %s29, 1
      %p246 = scmp.ne.s32.totalorder %s241, %s243
      %p247 = scmp.eq.s32.totalorder %s29, 0
      %p248 = por %p246, %p247
      %p249 = scmp.ne.s32.totalorder %s241, %s243
      %p250 = scmp.eq.s32.totalorder %s34, 1
      %p251 = por %p249, %p250
      %p252 = scmp.ne.s32.totalorder %s243, %s244
      %p253 = scmp.eq.s32.totalorder %s34, 0
      %p254 = por %p252, %p253
      %p255 = scmp.ne.s32.totalorder %s243, %s244
      %p256 = scmp.eq.s32.totalorder %s35, 1
      %p257 = por %p255, %p256
      %p259 = scmp.ne.s32.totalorder %s244, %s258
      %p260 = scmp.eq.s32.totalorder %s35, 0
      %p261 = por %p259, %p260
      %s262 = ssub.s32 %s36, %s48
      %s263 = ssub.s32 %s37, %s44
      %s264 = sor.u32 %s262, %s263
      %p265 = scmp.eq.s32.totalorder %s264, 0
      %s267 = sadd.s32 %s266, 1
      %s268 = scalar_select %p265, %s266, %s267
      %p271 = pneg %p265
      %p272 = scmp.eq.s32.totalorder %s29, 1
      %p273 = por %p271, %p272
      %p274 = scmp.ne.s32.totalorder %s266, %s269
      %p275 = scmp.eq.s32.totalorder %s29, 0
      %p276 = por %p274, %p275
      %p277 = scmp.ne.s32.totalorder %s266, %s269
      %p278 = scmp.eq.s32.totalorder %s34, 1
      %p279 = por %p277, %p278
      %p280 = scmp.ne.s32.totalorder %s269, %s270
      %p281 = scmp.eq.s32.totalorder %s34, 0
      %p282 = por %p280, %p281
      %p283 = scmp.ne.s32.totalorder %s269, %s270
      %p284 = scmp.eq.s32.totalorder %s35, 1
      %p285 = por %p283, %p284
      %p287 = scmp.ne.s32.totalorder %s270, %s286
      %p288 = scmp.eq.s32.totalorder %s35, 0
      %p289 = por %p287, %p288
      %p290 = scmp.le.s32.totalorder 1, %s29
      %p291 = scmp.lt.s32.totalorder %s29, 3
      %p292 = pnand %p290, %p291
      %p293 = pneg %p292
      // Predicated region
      $region9: #{tpu_custom_call.1} parent=5 // pred_check
        _
      $region10: #{tpu_custom_call.1} parent=5 // pred_check_branch
        %295 = sbr.rel (%p292) target = $region12
      $region11: #{tpu_custom_call.1} parent=5 // pred_region
        %s296 = ssub.s32 %s29, 1
        // Predicated region
        $region13: #{tpu_custom_call.1} parent=11 // pred_check
          %p297 = pneg %p170
        $region14: #{tpu_custom_call.1} parent=11 // pred_check_branch
          %299 = sbr.rel (%p297) target = $region16
        $region15: #{tpu_custom_call.1} parent=11 // pred_region
          %s301 = ssub.s32 512, 512
          %302 = vsyncadd [#allocation10], %s301
          %s303 = sshll.u32 [#allocation11], 4
          %s304 = int_to_ptr.vmem [resolvable:$true] %s303
          %309 = dma.hbm_to_vmem [thread:$0]  %s4, 512, %s304, [#allocation10], 128, 128, 8
        $region16: #{tpu_custom_call.1} parent=11 // pred_fallthru
          _
        // Predicated region
        $region17: #{tpu_custom_call.1} parent=11 // pred_check
          %p310 = pneg %p191
        $region18: #{tpu_custom_call.1} parent=11 // pred_check_branch
          %312 = sbr.rel (%p310) target = $region20
        $region19: #{tpu_custom_call.1} parent=11 // pred_region
          %s314 = ssub.s32 512, 512
          %315 = vsyncadd [#allocation13], %s314
          %s316 = sshll.u32 [#allocation12], 4
          %s317 = int_to_ptr.vmem [resolvable:$true] %s316
          %322 = dma.hbm_to_vmem [thread:$0]  %s5, 512, %s317, [#allocation13], 128, 128, 8
        $region20: #{tpu_custom_call.1} parent=11 // pred_fallthru
          _
        // Predicated region
        $region21: #{tpu_custom_call.1} parent=11 // pred_check
          %p323 = pneg %p212
        $region22: #{tpu_custom_call.1} parent=11 // pred_check_branch
          %325 = sbr.rel (%p323) target = $region24
        $region23: #{tpu_custom_call.1} parent=11 // pred_region
          %s327 = ssub.s32 512, 512
          %328 = vsyncadd [#allocation13], %s327
          %s329 = sshll.u32 [#allocation14], 4
          %s330 = int_to_ptr.vmem [resolvable:$true] %s329
          %335 = dma.hbm_to_vmem [thread:$0]  %s6, 512, %s330, [#allocation13], 128, 128, 8
        $region24: #{tpu_custom_call.1} parent=11 // pred_fallthru
          _
        // Predicated region
        $region25: #{tpu_custom_call.1} parent=11 // pred_check
          %p336 = pneg %p233
        $region26: #{tpu_custom_call.1} parent=11 // pred_check_branch
          %338 = sbr.rel (%p336) target = $region28
        $region27: #{tpu_custom_call.1} parent=11 // pred_region
          %s340 = ssub.s32 512, 512
          %341 = vsyncadd [#allocation16], %s340
          %s342 = sshll.u32 [#allocation15], 4
          %s343 = int_to_ptr.vmem [resolvable:$true] %s342
          %348 = dma.hbm_to_vmem [thread:$0]  %s7, 512, %s343, [#allocation16], 128, 128, 8
        $region28: #{tpu_custom_call.1} parent=11 // pred_fallthru
          _
        // Predicated region
        $region29: #{tpu_custom_call.1} parent=11 // pred_check
          %p349 = pneg %p254
        $region30: #{tpu_custom_call.1} parent=11 // pred_check_branch
          %351 = sbr.rel (%p349) target = $region32
        $region31: #{tpu_custom_call.1} parent=11 // pred_region
          _
        $region32: #{tpu_custom_call.1} parent=11 // pred_fallthru
          _
      $region12: #{tpu_custom_call.1} parent=5 // pred_fallthru
        _
      %p352 = scmp.lt.s32.totalorder %s29, 2
      // Predicated region
      $region33: #{tpu_custom_call.1} parent=5 // pred_check
        %p353 = pneg %p352
      $region34: #{tpu_custom_call.1} parent=5 // pred_check_branch
        %355 = sbr.rel (%p353) target = $region36
      $region35: #{tpu_custom_call.1} parent=5 // pred_region
        // Predicated region
        $region37: #{tpu_custom_call.1} parent=35 // pred_check
          %p356 = pneg %p63
        $region38: #{tpu_custom_call.1} parent=35 // pred_check_branch
          %358 = sbr.rel (%p356) target = $region40
        $region39: #{tpu_custom_call.1} parent=35 // pred_region
          %s359 = sand.u32 %s53, 1
          %s360 = scalar_lea.sflag [#allocation4], %s359
          %s361 = sand.u32 %s53, 1
          %s362 = smul.addr %s361, 8
          %s363 = scalar_lea.vmem [#allocation3], %s362
          %s365 = ssub.s32 128, 128
          %366 = vsyncadd %s360, %s365
          %s367 = sadd.s32 %s37, %s36
          %s368 = smul.addr %s367, 128
          %s369 = scalar_lea.hbm %s0, %s368
          %s371 = sshll.u32 %s363, 4
          %s372 = int_to_ptr.vmem [resolvable:$true] %s371
          %374 = dma.hbm_to_vmem [thread:$0]  %s369, 128, %s372, %s360
        $region40: #{tpu_custom_call.1} parent=35 // pred_fallthru
          _
        // Predicated region
        $region41: #{tpu_custom_call.1} parent=35 // pred_check
          %p375 = pneg %p89
        $region42: #{tpu_custom_call.1} parent=35 // pred_check_branch
          %377 = sbr.rel (%p375) target = $region44
        $region43: #{tpu_custom_call.1} parent=35 // pred_region
          %s378 = sand.u32 %s29, 1
          %s379 = scalar_lea.sflag [#allocation7], %s378
          %s380 = sand.u32 %s79, 1
          %s381 = smul.addr %s380, 8
          %s382 = scalar_lea.vmem [#allocation6], %s381
          %s384 = ssub.s32 128, 128
          %385 = vsyncadd %s379, %s384
          %s386 = smul.addr %s36, 128
          %s387 = scalar_lea.hbm %s1, %s386
          %s389 = sshll.u32 %s382, 4
          %s390 = int_to_ptr.vmem [resolvable:$true] %s389
          %392 = dma.hbm_to_vmem [thread:$0]  %s387, 128, %s390, %s379
        $region44: #{tpu_custom_call.1} parent=35 // pred_fallthru
          _
        // Predicated region
        $region45: #{tpu_custom_call.1} parent=35 // pred_check
          %p393 = pneg %p115
        $region46: #{tpu_custom_call.1} parent=35 // pred_check_branch
          %395 = sbr.rel (%p393) target = $region48
        $region47: #{tpu_custom_call.1} parent=35 // pred_region
          %s396 = sand.u32 %s29, 1
          %s397 = scalar_lea.sflag [#allocation7], %s396
          %s398 = sand.u32 %s105, 1
          %s399 = smul.addr %s398, 8
          %s400 = scalar_lea.vmem [#allocation8], %s399
          %s402 = ssub.s32 128, 128
          %403 = vsyncadd %s397, %s402
          %s404 = smul.addr %s36, 128
          %s405 = scalar_lea.hbm %s2, %s404
          %s407 = sshll.u32 %s400, 4
          %s408 = int_to_ptr.vmem [resolvable:$true] %s407
          %410 = dma.hbm_to_vmem [thread:$0]  %s405, 128, %s408, %s397
        $region48: #{tpu_custom_call.1} parent=35 // pred_fallthru
          _
        // Predicated region
        $region49: #{tpu_custom_call.1} parent=35 // pred_check
          %p411 = pneg %p143
        $region50: #{tpu_custom_call.1} parent=35 // pred_check_branch
          %413 = sbr.rel (%p411) target = $region52
        $region51: #{tpu_custom_call.1} parent=35 // pred_region
          %s414 = sand.u32 %s29, 1
          %s415 = scalar_lea.sflag [#allocation10], %s414
          %s416 = sand.u32 %s133, 1
          %s417 = smul.addr %s416, 8
          %s418 = scalar_lea.vmem [#allocation9], %s417
          %s420 = ssub.s32 128, 128
          %421 = vsyncadd %s415, %s420
          %s422 = smul.addr %s36, 4
          %s423 = sadd.s32 %s37, %s422
          %s424 = smul.addr %s423, 32
          %s425 = scalar_lea.hbm %s3, %s424
          %s426 = sshll.u32 %s418, 4
          %s427 = int_to_ptr.vmem [resolvable:$true] %s426
          %432 = dma.hbm_to_vmem [thread:$0]  %s425, 128, %s427, %s415, 32, 32, 2
        $region52: #{tpu_custom_call.1} parent=35 // pred_fallthru
          _
      $region36: #{tpu_custom_call.1} parent=5 // pred_fallthru
        _
      %p433 = scmp.le.s32.totalorder 1, %s29
      %p434 = scmp.lt.s32.totalorder %s29, 3
      %p435 = pnand %p433, %p434
      %p436 = pneg %p435
      // Predicated region
      $region53: #{tpu_custom_call.1} parent=5 // pred_check
        _
      $region54: #{tpu_custom_call.1} parent=5 // pred_check_branch
        %438 = sbr.rel (%p435) target = $region56
      $region55: #{tpu_custom_call.1} parent=5 // pred_region
        %s439 = ssub.s32 %s29, 1
        %s440 = sand.u32 %s56, 1
        %s441 = scalar_lea.sflag [#allocation4], %s440
        %s442 = sand.u32 %s56, 1
        %s443 = smul.addr %s442, 8
        %s444 = scalar_lea.vmem [#allocation3], %s443
        // Predicated region
        $region57: #{tpu_custom_call.1} parent=55 // pred_check
          %p445 = pneg %p69
        $region58: #{tpu_custom_call.1} parent=55 // pred_check_branch
          %447 = sbr.rel (%p445) target = $region60
        $region59: #{tpu_custom_call.1} parent=55 // pred_region
          %448 = dma.done %s441, 128
        $region60: #{tpu_custom_call.1} parent=55 // pred_fallthru
          _
        %s449 = sand.u32 %s34, 1
        %s450 = scalar_lea.sflag [#allocation7], %s449
        %s451 = sand.u32 %s82, 1
        %s452 = smul.addr %s451, 8
        %s453 = scalar_lea.vmem [#allocation6], %s452
        // Predicated region
        $region61: #{tpu_custom_call.1} parent=55 // pred_check
          %p454 = pneg %p95
        $region62: #{tpu_custom_call.1} parent=55 // pred_check_branch
          %456 = sbr.rel (%p454) target = $region64
        $region63: #{tpu_custom_call.1} parent=55 // pred_region
          %457 = dma.done %s450, 128
        $region64: #{tpu_custom_call.1} parent=55 // pred_fallthru
          _
        %s458 = sand.u32 %s34, 1
        %s459 = scalar_lea.sflag [#allocation7], %s458
        %s460 = sand.u32 %s108, 1
        %s461 = smul.addr %s460, 8
        %s462 = scalar_lea.vmem [#allocation8], %s461
        // Predicated region
        $region65: #{tpu_custom_call.1} parent=55 // pred_check
          %p463 = pneg %p121
        $region66: #{tpu_custom_call.1} parent=55 // pred_check_branch
          %465 = sbr.rel (%p463) target = $region68
        $region67: #{tpu_custom_call.1} parent=55 // pred_region
          %466 = dma.done %s459, 128
        $region68: #{tpu_custom_call.1} parent=55 // pred_fallthru
          _
        %s467 = sand.u32 %s34, 1
        %s468 = scalar_lea.sflag [#allocation10], %s467
        %s469 = sand.u32 %s136, 1
        %s470 = smul.addr %s469, 8
        %s471 = scalar_lea.vmem [#allocation9], %s470
        // Predicated region
        $region69: #{tpu_custom_call.1} parent=55 // pred_check
          %p472 = pneg %p149
        $region70: #{tpu_custom_call.1} parent=55 // pred_check_branch
          %474 = sbr.rel (%p472) target = $region72
        $region71: #{tpu_custom_call.1} parent=55 // pred_region
          %475 = dma.done %s468, 128
        $region72: #{tpu_custom_call.1} parent=55 // pred_fallthru
          _
        // Predicated region
        $region73: #{tpu_custom_call.1} parent=55 // pred_check
          %p476 = pneg %p170
        $region74: #{tpu_custom_call.1} parent=55 // pred_check_branch
          %478 = sbr.rel (%p476) target = $region76
        $region75: #{tpu_custom_call.1} parent=55 // pred_region
          %479 = dma.done [#allocation10], 512
        $region76: #{tpu_custom_call.1} parent=55 // pred_fallthru
          _
        // Predicated region
        $region77: #{tpu_custom_call.1} parent=55 // pred_check
          %p480 = pneg %p191
        $region78: #{tpu_custom_call.1} parent=55 // pred_check_branch
          %482 = sbr.rel (%p480) target = $region80
        $region79: #{tpu_custom_call.1} parent=55 // pred_region
          %483 = dma.done [#allocation13], 512
        $region80: #{tpu_custom_call.1} parent=55 // pred_fallthru
          _
        // Predicated region
        $region81: #{tpu_custom_call.1} parent=55 // pred_check
          %p484 = pneg %p212
        $region82: #{tpu_custom_call.1} parent=55 // pred_check_branch
          %486 = sbr.rel (%p484) target = $region84
        $region83: #{tpu_custom_call.1} parent=55 // pred_region
          %487 = dma.done [#allocation13], 512
        $region84: #{tpu_custom_call.1} parent=55 // pred_fallthru
          _
        // Predicated region
        $region85: #{tpu_custom_call.1} parent=55 // pred_check
          %p488 = pneg %p233
        $region86: #{tpu_custom_call.1} parent=55 // pred_check_branch
          %490 = sbr.rel (%p488) target = $region88
        $region87: #{tpu_custom_call.1} parent=55 // pred_region
          %491 = dma.done [#allocation16], 512
        $region88: #{tpu_custom_call.1} parent=55 // pred_fallthru
          _
        %s492 = sand.u32 %s56, 1
        %s493 = scalar_lea.sflag [#allocation4], %s492
        %s494 = sand.u32 %s56, 1
        %s495 = smul.addr %s494, 8
        %s496 = scalar_lea.vmem [#allocation3], %s495
        %p497 = pneg %p69
        %p498 = pneg %p66
        %s499 = sand.u32 %s34, 1
        %s500 = scalar_lea.sflag [#allocation7], %s499
        %s501 = sand.u32 %s82, 1
        %s502 = smul.addr %s501, 8
        %s503 = scalar_lea.vmem [#allocation6], %s502
        %p504 = pneg %p95
        %p505 = pneg %p92
        %s506 = sand.u32 %s34, 1
        %s507 = scalar_lea.sflag [#allocation7], %s506
        %s508 = sand.u32 %s108, 1
        %s509 = smul.addr %s508, 8
        %s510 = scalar_lea.vmem [#allocation8], %s509
        %p511 = pneg %p121
        %p512 = pneg %p118
        %s513 = sand.u32 %s34, 1
        %s514 = scalar_lea.sflag [#allocation10], %s513
        %s515 = sand.u32 %s136, 1
        %s516 = smul.addr %s515, 8
        %s517 = scalar_lea.vmem [#allocation9], %s516
        %p518 = pneg %p149
        %p519 = pneg %p146
        %p520 = pneg %p170
        %p521 = pneg %p167
        %p522 = pneg %p191
        %p523 = pneg %p188
        %p524 = pneg %p212
        %p525 = pneg %p209
        %p526 = pneg %p233
        %p527 = pneg %p230
        %p528 = pneg %p254
        %p529 = pneg %p251
        %p530 = pneg %p282
        %p531 = pneg %p279
        %s532 = sand.u32 %s269, 1
        %s533 = scalar_lea.sflag [#allocation5], %s532
        %s534 = sand.u32 %s269, 1
        %s535 = smul.addr %s534, 8
        %s536 = scalar_lea.vmem [#allocation17], %s535
        %v537 = vld [vmem:[%s444] sm:$0xff]
        %v538 = vld [vmem:[#allocation11] sm:$0xff]
        %v539 = vld [vmem:[#allocation11 + $0x8] sm:$0xff]
        %v540 = vld [vmem:[#allocation11 + $0x10] sm:$0xff]
        %v541 = vld [vmem:[#allocation11 + $0x18] sm:$0xff]
        %vm542 = vcmask 261120
        %v544 = vsel %vm542, %v537, 0
        %546 = vmatprep.subr.mxu0 0.0
        %547 = vmatpush1.msra.mxu0 %v538
        %548 = vmatprep.subr.mxu0 0.0
        %549 = vmatpush1.msra.mxu0 %v539
        %550 = vmatprep.subr.mxu0 0.0
        %551 = vmatpush1.msra.mxu0 %v540
        %552 = vmatprep.subr.mxu0 0.0
        %553 = vmatpush1.msra.mxu0 %v541
        %554 = vmatprep.subr.mxu0 0.0
        %555 = vmatpush1.msra.mxu0 0.0
        %556 = vmatprep.subr.mxu0 0.0
        %557 = vmatpush1.msra.mxu0 0.0
        %558 = vmatprep.subr.mxu0 0.0
        %559 = vmatpush1.msra.mxu0 0.0
        %560 = vmatprep.subr.mxu0 0.0
        %561 = vmatpush1.msra.mxu0 0.0
        %562 = vmatprep.subr.mxu0 0.0
        %563 = vmatpush1.msra.mxu0 0.0
        %564 = vmatprep.subr.mxu0 0.0
        %565 = vmatpush1.msra.mxu0 0.0
        %566 = vmatprep.subr.mxu0 0.0
        %567 = vmatpush1.msra.mxu0 0.0
        %568 = vmatprep.subr.mxu0 0.0
        %569 = vmatpush1.msra.mxu0 0.0
        %570 = vmatprep.subr.mxu0 0.0
        %571 = vmatpush1.msra.mxu0 0.0
        %572 = vmatprep.subr.mxu0 0.0
        %573 = vmatpush1.msra.mxu0 0.0
        %574 = vmatprep.subr.mxu0 0.0
        %575 = vmatpush1.msra.mxu0 0.0
        %576 = vmatprep.subr.mxu0 0.0
        %577 = vmatpush1.msra.mxu0 0.0
        %578 = vmatprep.subr.mxu0 0.0
        %579 = vmatpush1.msra.mxu0 0.0
        %580 = vmatprep.subr.mxu0 0.0
        %581 = vmatpush1.msra.mxu0 0.0
        %582 = vmatprep.subr.mxu0 0.0
        %583 = vmatpush1.msra.mxu0 0.0
        %584 = vmatprep.subr.mxu0 0.0
        %585 = vmatpush1.msra.mxu0 0.0
        %586 = vmatprep.subr.mxu0 0.0
        %587 = vmatpush1.msra.mxu0 0.0
        %588 = vmatprep.subr.mxu0 0.0
        %589 = vmatpush1.msra.mxu0 0.0
        %590 = vmatprep.subr.mxu0 0.0
        %591 = vmatpush1.msra.mxu0 0.0
        %592 = vmatprep.subr.mxu0 0.0
        %593 = vmatpush1.msra.mxu0 0.0
        %594 = vmatprep.subr.mxu0 0.0
        %595 = vmatpush1.msra.mxu0 0.0
        %596 = vmatprep.subr.mxu0 0.0
        %597 = vmatpush1.msra.mxu0 0.0
        %598 = vmatprep.subr.mxu0 0.0
        %599 = vmatpush1.msra.mxu0 0.0
        %600 = vmatprep.subr.mxu0 0.0
        %601 = vmatpush1.msra.mxu0 0.0
        %602 = vmatprep.subr.mxu0 0.0
        %603 = vmatpush1.msra.mxu0 0.0
        %604 = vmatprep.subr.mxu0 0.0
        %605 = vmatpush1.msra.mxu0 0.0
        %606 = vmatprep.subr.mxu0 0.0
        %607 = vmatpush1.msra.mxu0 0.0
        %608 = vmatprep.subr.mxu0 0.0
        %609 = vmatpush1.msra.mxu0 0.0
        %610 = vmatprep.mubr.f32.mxu0 0.0
        %611 = vmatmul.mubr.f32.gmra.mrb[0].mxu0 %v544
        %v612 = vpop.f32.mrb[0].mxu0
        %v613 = vadd.f32 0.0, %v612
        %v614 = vpop.f32.mrb[0].mxu0
        %615 = vdwg.mxu0
        %v616 = vld [vmem:[%s453] sm:$0xff]
        %v617 = vld [vmem:[#allocation12] sm:$0xff]
        %v618 = vld [vmem:[#allocation12 + $0x8] sm:$0xff]
        %v619 = vld [vmem:[#allocation12 + $0x10] sm:$0xff]
        %v620 = vld [vmem:[#allocation12 + $0x18] sm:$0xff]
        %v622 = vsel %vm542, %v616, 0
        %624 = vmatprep.subr.mxu0 0.0
        %625 = vmatpush1.msra.mxu0 %v617
        %626 = vmatprep.subr.mxu0 0.0
        %627 = vmatpush1.msra.mxu0 %v618
        %628 = vmatprep.subr.mxu0 0.0
        %629 = vmatpush1.msra.mxu0 %v619
        %630 = vmatprep.subr.mxu0 0.0
        %631 = vmatpush1.msra.mxu0 %v620
        %632 = vmatprep.subr.mxu0 0.0
        %633 = vmatpush1.msra.mxu0 0.0
        %634 = vmatprep.subr.mxu0 0.0
        %635 = vmatpush1.msra.mxu0 0.0
        %636 = vmatprep.subr.mxu0 0.0
        %637 = vmatpush1.msra.mxu0 0.0
        %638 = vmatprep.subr.mxu0 0.0
        %639 = vmatpush1.msra.mxu0 0.0
        %640 = vmatprep.subr.mxu0 0.0
        %641 = vmatpush1.msra.mxu0 0.0
        %642 = vmatprep.subr.mxu0 0.0
        %643 = vmatpush1.msra.mxu0 0.0
        %644 = vmatprep.subr.mxu0 0.0
        %645 = vmatpush1.msra.mxu0 0.0
        %646 = vmatprep.subr.mxu0 0.0
        %647 = vmatpush1.msra.mxu0 0.0
        %648 = vmatprep.subr.mxu0 0.0
        %649 = vmatpush1.msra.mxu0 0.0
        %650 = vmatprep.subr.mxu0 0.0
        %651 = vmatpush1.msra.mxu0 0.0
        %652 = vmatprep.subr.mxu0 0.0
        %653 = vmatpush1.msra.mxu0 0.0
        %654 = vmatprep.subr.mxu0 0.0
        %655 = vmatpush1.msra.mxu0 0.0
        %656 = vmatprep.subr.mxu0 0.0
        %657 = vmatpush1.msra.mxu0 0.0
        %658 = vmatprep.subr.mxu0 0.0
        %659 = vmatpush1.msra.mxu0 0.0
        %660 = vmatprep.subr.mxu0 0.0
        %661 = vmatpush1.msra.mxu0 0.0
        %662 = vmatprep.subr.mxu0 0.0
        %663 = vmatpush1.msra.mxu0 0.0
        %664 = vmatprep.subr.mxu0 0.0
        %665 = vmatpush1.msra.mxu0 0.0
        %666 = vmatprep.subr.mxu0 0.0
        %667 = vmatpush1.msra.mxu0 0.0
        %668 = vmatprep.subr.mxu0 0.0
        %669 = vmatpush1.msra.mxu0 0.0
        %670 = vmatprep.subr.mxu0 0.0
        %671 = vmatpush1.msra.mxu0 0.0
        %672 = vmatprep.subr.mxu0 0.0
        %673 = vmatpush1.msra.mxu0 0.0
        %674 = vmatprep.subr.mxu0 0.0
        %675 = vmatpush1.msra.mxu0 0.0
        %676 = vmatprep.subr.mxu0 0.0
        %677 = vmatpush1.msra.mxu0 0.0
        %678 = vmatprep.subr.mxu0 0.0
        %679 = vmatpush1.msra.mxu0 0.0
        %680 = vmatprep.subr.mxu0 0.0
        %681 = vmatpush1.msra.mxu0 0.0
        %682 = vmatprep.subr.mxu0 0.0
        %683 = vmatpush1.msra.mxu0 0.0
        %684 = vmatprep.subr.mxu0 0.0
        %685 = vmatpush1.msra.mxu0 0.0
        %686 = vmatprep.subr.mxu0 0.0
        %687 = vmatpush1.msra.mxu0 0.0
        %688 = vmatprep.mubr.f32.mxu0 0.0
        %689 = vmatmul.mubr.f32.gmra.mrb[0].mxu0 %v622
        %v690 = vpop.f32.mrb[0].mxu0
        %v691 = vadd.f32 0.0, %v690
        %v692 = vpop.f32.mrb[0].mxu0
        %693 = vdwg.mxu0
        %v694 = vld [vmem:[%s462] sm:$0xff]
        %v695 = vld [vmem:[#allocation14] sm:$0xff]
        %v696 = vld [vmem:[#allocation14 + $0x8] sm:$0xff]
        %v697 = vld [vmem:[#allocation14 + $0x10] sm:$0xff]
        %v698 = vld [vmem:[#allocation14 + $0x18] sm:$0xff]
        %v700 = vsel %vm542, %v694, 0
        %702 = vmatprep.subr.mxu0 0.0
        %703 = vmatpush1.msra.mxu0 %v695
        %704 = vmatprep.subr.mxu0 0.0
        %705 = vmatpush1.msra.mxu0 %v696
        %706 = vmatprep.subr.mxu0 0.0
        %707 = vmatpush1.msra.mxu0 %v697
        %708 = vmatprep.subr.mxu0 0.0
        %709 = vmatpush1.msra.mxu0 %v698
        %710 = vmatprep.subr.mxu0 0.0
        %711 = vmatpush1.msra.mxu0 0.0
        %712 = vmatprep.subr.mxu0 0.0
        %713 = vmatpush1.msra.mxu0 0.0
        %714 = vmatprep.subr.mxu0 0.0
        %715 = vmatpush1.msra.mxu0 0.0
        %716 = vmatprep.subr.mxu0 0.0
        %717 = vmatpush1.msra.mxu0 0.0
        %718 = vmatprep.subr.mxu0 0.0
        %719 = vmatpush1.msra.mxu0 0.0
        %720 = vmatprep.subr.mxu0 0.0
        %721 = vmatpush1.msra.mxu0 0.0
        %722 = vmatprep.subr.mxu0 0.0
        %723 = vmatpush1.msra.mxu0 0.0
        %724 = vmatprep.subr.mxu0 0.0
        %725 = vmatpush1.msra.mxu0 0.0
        %726 = vmatprep.subr.mxu0 0.0
        %727 = vmatpush1.msra.mxu0 0.0
        %728 = vmatprep.subr.mxu0 0.0
        %729 = vmatpush1.msra.mxu0 0.0
        %730 = vmatprep.subr.mxu0 0.0
        %731 = vmatpush1.msra.mxu0 0.0
        %732 = vmatprep.subr.mxu0 0.0
        %733 = vmatpush1.msra.mxu0 0.0
        %734 = vmatprep.subr.mxu0 0.0
        %735 = vmatpush1.msra.mxu0 0.0
        %736 = vmatprep.subr.mxu0 0.0
        %737 = vmatpush1.msra.mxu0 0.0
        %738 = vmatprep.subr.mxu0 0.0
        %739 = vmatpush1.msra.mxu0 0.0
        %740 = vmatprep.subr.mxu0 0.0
        %741 = vmatpush1.msra.mxu0 0.0
        %742 = vmatprep.subr.mxu0 0.0
        %743 = vmatpush1.msra.mxu0 0.0
        %744 = vmatprep.subr.mxu0 0.0
        %745 = vmatpush1.msra.mxu0 0.0
        %746 = vmatprep.subr.mxu0 0.0
        %747 = vmatpush1.msra.mxu0 0.0
        %748 = vmatprep.subr.mxu0 0.0
        %749 = vmatpush1.msra.mxu0 0.0
        %750 = vmatprep.subr.mxu0 0.0
        %751 = vmatpush1.msra.mxu0 0.0
        %752 = vmatprep.subr.mxu0 0.0
        %753 = vmatpush1.msra.mxu0 0.0
        %754 = vmatprep.subr.mxu0 0.0
        %755 = vmatpush1.msra.mxu0 0.0
        %756 = vmatprep.subr.mxu0 0.0
        %757 = vmatpush1.msra.mxu0 0.0
        %758 = vmatprep.subr.mxu0 0.0
        %759 = vmatpush1.msra.mxu0 0.0
        %760 = vmatprep.subr.mxu0 0.0
        %761 = vmatpush1.msra.mxu0 0.0
        %762 = vmatprep.subr.mxu0 0.0
        %763 = vmatpush1.msra.mxu0 0.0
        %764 = vmatprep.subr.mxu0 0.0
        %765 = vmatpush1.msra.mxu0 0.0
        %766 = vmatprep.mubr.f32.mxu0 0.0
        %767 = vmatmul.mubr.f32.gmra.mrb[0].mxu0 %v700
        %v768 = vpop.f32.mrb[0].mxu0
        %v769 = vadd.f32 0.0, %v768
        %v770 = vpop.f32.mrb[0].mxu0
        %771 = vdwg.mxu0
        %vm772 = vcmask 64512
        %v774 = vsel %vm772, %v613, 0
        %v777 = vsel %vm772, %v691, 0
        %779 = vmatprep.subr.mxu0 0.0
        %780 = vmatpush1.xpose.msra.mxu0 %v777
        %781 = vmatprep.subr.mxu0 0.0
        %782 = vmatpush1.xpose.msra.mxu0 0.0
        %783 = vmatprep.subr.mxu0 0.0
        %784 = vmatpush1.xpose.msra.mxu0 0.0
        %785 = vmatprep.subr.mxu0 0.0
        %786 = vmatpush1.xpose.msra.mxu0 0.0
        %787 = vmatprep.subr.mxu0 0.0
        %788 = vmatpush1.xpose.msra.mxu0 0.0
        %789 = vmatprep.subr.mxu0 0.0
        %790 = vmatpush1.xpose.msra.mxu0 0.0
        %791 = vmatprep.subr.mxu0 0.0
        %792 = vmatpush1.xpose.msra.mxu0 0.0
        %793 = vmatprep.subr.mxu0 0.0
        %794 = vmatpush1.xpose.msra.mxu0 0.0
        %795 = vmatprep.subr.mxu0 0.0
        %796 = vmatpush1.xpose.msra.mxu0 0.0
        %797 = vmatprep.subr.mxu0 0.0
        %798 = vmatpush1.xpose.msra.mxu0 0.0
        %799 = vmatprep.subr.mxu0 0.0
        %800 = vmatpush1.xpose.msra.mxu0 0.0
        %801 = vmatprep.subr.mxu0 0.0
        %802 = vmatpush1.xpose.msra.mxu0 0.0
        %803 = vmatprep.subr.mxu0 0.0
        %804 = vmatpush1.xpose.msra.mxu0 0.0
        %805 = vmatprep.subr.mxu0 0.0
        %806 = vmatpush1.xpose.msra.mxu0 0.0
        %807 = vmatprep.subr.mxu0 0.0
        %808 = vmatpush1.xpose.msra.mxu0 0.0
        %809 = vmatprep.subr.mxu0 0.0
        %810 = vmatpush1.xpose.msra.mxu0 0.0
        %811 = vmatprep.subr.mxu0 0.0
        %812 = vmatpush1.xpose.msra.mxu0 0.0
        %813 = vmatprep.subr.mxu0 0.0
        %814 = vmatpush1.xpose.msra.mxu0 0.0
        %815 = vmatprep.subr.mxu0 0.0
        %816 = vmatpush1.xpose.msra.mxu0 0.0
        %817 = vmatprep.subr.mxu0 0.0
        %818 = vmatpush1.xpose.msra.mxu0 0.0
        %819 = vmatprep.subr.mxu0 0.0
        %820 = vmatpush1.xpose.msra.mxu0 0.0
        %821 = vmatprep.subr.mxu0 0.0
        %822 = vmatpush1.xpose.msra.mxu0 0.0
        %823 = vmatprep.subr.mxu0 0.0
        %824 = vmatpush1.xpose.msra.mxu0 0.0
        %825 = vmatprep.subr.mxu0 0.0
        %826 = vmatpush1.xpose.msra.mxu0 0.0
        %827 = vmatprep.subr.mxu0 0.0
        %828 = vmatpush1.xpose.msra.mxu0 0.0
        %829 = vmatprep.subr.mxu0 0.0
        %830 = vmatpush1.xpose.msra.mxu0 0.0
        %831 = vmatprep.subr.mxu0 0.0
        %832 = vmatpush1.xpose.msra.mxu0 0.0
        %833 = vmatprep.subr.mxu0 0.0
        %834 = vmatpush1.xpose.msra.mxu0 0.0
        %835 = vmatprep.subr.mxu0 0.0
        %836 = vmatpush1.xpose.msra.mxu0 0.0
        %837 = vmatprep.subr.mxu0 0.0
        %838 = vmatpush1.xpose.msra.mxu0 0.0
        %839 = vmatprep.subr.mxu0 0.0
        %840 = vmatpush1.xpose.msra.mxu0 0.0
        %841 = vmatprep.subr.mxu0 0.0
        %842 = vmatpush1.xpose.msra.mxu0 0.0
        %843 = vmatprep.mubr.f32.mxu0 0.0
        %844 = vmatmul.mubr.f32.gmra.mrb[0].mxu0 %v774
        %v845 = vpop.f32.mrb[0].mxu0
        %v846 = vadd.f32 0.0, %v845
        %v847 = vpop.f32.mrb[0].mxu0
        %848 = vdwg.mxu0
        %v849 = vld [vmem:[%s471] sm:$0x3]
        %v850 = vunpack.c.0.s8 %v849
        %vm851 = vcmp.eq.s32.totalorder %v850, 0
        %v852 = vsel %vm851, -1e+20, %v846
        %v853 = vsel %vm772, %v852, -inf
        %854 = vmax.xlane.f32.xlu0 %v853
        %v855 = vpop.xlane.xlu0 %854
        %v856 = vsub.f32 %v852, %v855
        %v857 = vmul.f32 %v856, 1.442695
        %v858 = vpow.pop %v857
        %v859 = vsel %vm772, %v858, 0.0
        %860 = vadd.xlane.f32.xlu0 %v859
        %v861 = vpop.xlane.xlu0 %860
        %v862 = vrcp.pop %v861
        %v863 = vmul.f32 %v858, %v862
        %v865 = vsel %vm772, %v863, 0
        %867 = vmatprep.subr.mxu0 0.0
        %868 = vmatpush1.msra.mxu0 %v769
        %869 = vmatprep.subr.mxu0 0.0
        %870 = vmatpush1.msra.mxu0 0.0
        %871 = vmatprep.subr.mxu0 0.0
        %872 = vmatpush1.msra.mxu0 0.0
        %873 = vmatprep.subr.mxu0 0.0
        %874 = vmatpush1.msra.mxu0 0.0
        %875 = vmatprep.subr.mxu0 0.0
        %876 = vmatpush1.msra.mxu0 0.0
        %877 = vmatprep.subr.mxu0 0.0
        %878 = vmatpush1.msra.mxu0 0.0
        %879 = vmatprep.subr.mxu0 0.0
        %880 = vmatpush1.msra.mxu0 0.0
        %881 = vmatprep.subr.mxu0 0.0
        %882 = vmatpush1.msra.mxu0 0.0
        %883 = vmatprep.subr.mxu0 0.0
        %884 = vmatpush1.msra.mxu0 0.0
        %885 = vmatprep.subr.mxu0 0.0
        %886 = vmatpush1.msra.mxu0 0.0
        %887 = vmatprep.subr.mxu0 0.0
        %888 = vmatpush1.msra.mxu0 0.0
        %889 = vmatprep.subr.mxu0 0.0
        %890 = vmatpush1.msra.mxu0 0.0
        %891 = vmatprep.subr.mxu0 0.0
        %892 = vmatpush1.msra.mxu0 0.0
        %893 = vmatprep.subr.mxu0 0.0
        %894 = vmatpush1.msra.mxu0 0.0
        %895 = vmatprep.subr.mxu0 0.0
        %896 = vmatpush1.msra.mxu0 0.0
        %897 = vmatprep.subr.mxu0 0.0
        %898 = vmatpush1.msra.mxu0 0.0
        %899 = vmatprep.subr.mxu0 0.0
        %900 = vmatpush1.msra.mxu0 0.0
        %901 = vmatprep.subr.mxu0 0.0
        %902 = vmatpush1.msra.mxu0 0.0
        %903 = vmatprep.subr.mxu0 0.0
        %904 = vmatpush1.msra.mxu0 0.0
        %905 = vmatprep.subr.mxu0 0.0
        %906 = vmatpush1.msra.mxu0 0.0
        %907 = vmatprep.subr.mxu0 0.0
        %908 = vmatpush1.msra.mxu0 0.0
        %909 = vmatprep.subr.mxu0 0.0
        %910 = vmatpush1.msra.mxu0 0.0
        %911 = vmatprep.subr.mxu0 0.0
        %912 = vmatpush1.msra.mxu0 0.0
        %913 = vmatprep.subr.mxu0 0.0
        %914 = vmatpush1.msra.mxu0 0.0
        %915 = vmatprep.subr.mxu0 0.0
        %916 = vmatpush1.msra.mxu0 0.0
        %917 = vmatprep.subr.mxu0 0.0
        %918 = vmatpush1.msra.mxu0 0.0
        %919 = vmatprep.subr.mxu0 0.0
        %920 = vmatpush1.msra.mxu0 0.0
        %921 = vmatprep.subr.mxu0 0.0
        %922 = vmatpush1.msra.mxu0 0.0
        %923 = vmatprep.subr.mxu0 0.0
        %924 = vmatpush1.msra.mxu0 0.0
        %925 = vmatprep.subr.mxu0 0.0
        %926 = vmatpush1.msra.mxu0 0.0
        %927 = vmatprep.subr.mxu0 0.0
        %928 = vmatpush1.msra.mxu0 0.0
        %929 = vmatprep.subr.mxu0 0.0
        %930 = vmatpush1.msra.mxu0 0.0
        %931 = vmatprep.mubr.f32.mxu0 0.0
        %932 = vmatmul.mubr.f32.gmra.mrb[0].mxu0 %v865
        %v933 = vpop.f32.mrb[0].mxu0
        %v934 = vadd.f32 0.0, %v933
        %v935 = vpop.f32.mrb[0].mxu0
        %936 = vdwg.mxu0
        %937 = vst.msk [vmem:[#allocation2] sm:$0xff] %vm772, %v934
        %938 = vrot.lane.b32.xlu0 %v613, 120
        %v939 = vpop.permute.xlu0 %938
        %940 = vrot.lane.b32.xlu0 %v691, 120
        %v941 = vpop.permute.xlu0 %940
        %v942 = vsel %vm772, %v939, 0
        %v944 = vsel %vm772, %v941, 0
        %946 = vmatprep.subr.mxu0 0.0
        %947 = vmatpush1.xpose.msra.mxu0 %v944
        %948 = vmatprep.subr.mxu0 0.0
        %949 = vmatpush1.xpose.msra.mxu0 0.0
        %950 = vmatprep.subr.mxu0 0.0
        %951 = vmatpush1.xpose.msra.mxu0 0.0
        %952 = vmatprep.subr.mxu0 0.0
        %953 = vmatpush1.xpose.msra.mxu0 0.0
        %954 = vmatprep.subr.mxu0 0.0
        %955 = vmatpush1.xpose.msra.mxu0 0.0
        %956 = vmatprep.subr.mxu0 0.0
        %957 = vmatpush1.xpose.msra.mxu0 0.0
        %958 = vmatprep.subr.mxu0 0.0
        %959 = vmatpush1.xpose.msra.mxu0 0.0
        %960 = vmatprep.subr.mxu0 0.0
        %961 = vmatpush1.xpose.msra.mxu0 0.0
        %962 = vmatprep.subr.mxu0 0.0
        %963 = vmatpush1.xpose.msra.mxu0 0.0
        %964 = vmatprep.subr.mxu0 0.0
        %965 = vmatpush1.xpose.msra.mxu0 0.0
        %966 = vmatprep.subr.mxu0 0.0
        %967 = vmatpush1.xpose.msra.mxu0 0.0
        %968 = vmatprep.subr.mxu0 0.0
        %969 = vmatpush1.xpose.msra.mxu0 0.0
        %970 = vmatprep.subr.mxu0 0.0
        %971 = vmatpush1.xpose.msra.mxu0 0.0
        %972 = vmatprep.subr.mxu0 0.0
        %973 = vmatpush1.xpose.msra.mxu0 0.0
        %974 = vmatprep.subr.mxu0 0.0
        %975 = vmatpush1.xpose.msra.mxu0 0.0
        %976 = vmatprep.subr.mxu0 0.0
        %977 = vmatpush1.xpose.msra.mxu0 0.0
        %978 = vmatprep.subr.mxu0 0.0
        %979 = vmatpush1.xpose.msra.mxu0 0.0
        %980 = vmatprep.subr.mxu0 0.0
        %981 = vmatpush1.xpose.msra.mxu0 0.0
        %982 = vmatprep.subr.mxu0 0.0
        %983 = vmatpush1.xpose.msra.mxu0 0.0
        %984 = vmatprep.subr.mxu0 0.0
        %985 = vmatpush1.xpose.msra.mxu0 0.0
        %986 = vmatprep.subr.mxu0 0.0
        %987 = vmatpush1.xpose.msra.mxu0 0.0
        %988 = vmatprep.subr.mxu0 0.0
        %989 = vmatpush1.xpose.msra.mxu0 0.0
        %990 = vmatprep.subr.mxu0 0.0
        %991 = vmatpush1.xpose.msra.mxu0 0.0
        %992 = vmatprep.subr.mxu0 0.0
        %993 = vmatpush1.xpose.msra.mxu0 0.0
        %994 = vmatprep.subr.mxu0 0.0
        %995 = vmatpush1.xpose.msra.mxu0 0.0
        %996 = vmatprep.subr.mxu0 0.0
        %997 = vmatpush1.xpose.msra.mxu0 0.0
        %998 = vmatprep.subr.mxu0 0.0
        %999 = vmatpush1.xpose.msra.mxu0 0.0
        %1000 = vmatprep.subr.mxu0 0.0
        %1001 = vmatpush1.xpose.msra.mxu0 0.0
        %1002 = vmatprep.subr.mxu0 0.0
        %1003 = vmatpush1.xpose.msra.mxu0 0.0
        %1004 = vmatprep.subr.mxu0 0.0
        %1005 = vmatpush1.xpose.msra.mxu0 0.0
        %1006 = vmatprep.subr.mxu0 0.0
        %1007 = vmatpush1.xpose.msra.mxu0 0.0
        %1008 = vmatprep.subr.mxu0 0.0
        %1009 = vmatpush1.xpose.msra.mxu0 0.0
        %1010 = vmatprep.mubr.f32.mxu0 0.0
        %1011 = vmatmul.mubr.f32.gmra.mrb[0].mxu0 %v942
        %v1012 = vpop.f32.mrb[0].mxu0
        %v1013 = vadd.f32 0.0, %v1012
        %v1014 = vpop.f32.mrb[0].mxu0
        %1015 = vdwg.mxu0
        %s1016 = scalar_lea.vmem %s471, 2 [#allocation9]
        %v1017 = vld [vmem:[%s1016] sm:$0x3]
        %v1018 = vunpack.c.0.s8 %v1017
        %vm1019 = vcmp.eq.s32.totalorder %v1018, 0
        %v1020 = vsel %vm1019, -1e+20, %v1013
        %v1021 = vsel %vm772, %v1020, -inf
        %1022 = vmax.xlane.f32.xlu0 %v1021
        %v1023 = vpop.xlane.xlu0 %1022
        %v1024 = vsub.f32 %v1020, %v1023
        %v1025 = vmul.f32 %v1024, 1.442695
        %v1026 = vpow.pop %v1025
        %v1027 = vsel %vm772, %v1026, 0.0
        %1028 = vadd.xlane.f32.xlu0 %v1027
        %v1029 = vpop.xlane.xlu0 %1028
        %v1030 = vrcp.pop %v1029
        %v1031 = vmul.f32 %v1026, %v1030
        %1033 = vrot.lane.b32.xlu0 %v769, 120
        %v1034 = vpop.permute.xlu0 %1033
        %v1037 = vsel %vm772, %v1031, 0
        %1039 = vmatprep.subr.mxu0 0.0
        %1040 = vmatpush1.msra.mxu0 %v1034
        %1041 = vmatprep.subr.mxu0 0.0
        %1042 = vmatpush1.msra.mxu0 0.0
        %1043 = vmatprep.subr.mxu0 0.0
        %1044 = vmatpush1.msra.mxu0 0.0
        %1045 = vmatprep.subr.mxu0 0.0
        %1046 = vmatpush1.msra.mxu0 0.0
        %1047 = vmatprep.subr.mxu0 0.0
        %1048 = vmatpush1.msra.mxu0 0.0
        %1049 = vmatprep.subr.mxu0 0.0
        %1050 = vmatpush1.msra.mxu0 0.0
        %1051 = vmatprep.subr.mxu0 0.0
        %1052 = vmatpush1.msra.mxu0 0.0
        %1053 = vmatprep.subr.mxu0 0.0
        %1054 = vmatpush1.msra.mxu0 0.0
        %1055 = vmatprep.subr.mxu0 0.0
        %1056 = vmatpush1.msra.mxu0 0.0
        %1057 = vmatprep.subr.mxu0 0.0
        %1058 = vmatpush1.msra.mxu0 0.0
        %1059 = vmatprep.subr.mxu0 0.0
        %1060 = vmatpush1.msra.mxu0 0.0
        %1061 = vmatprep.subr.mxu0 0.0
        %1062 = vmatpush1.msra.mxu0 0.0
        %1063 = vmatprep.subr.mxu0 0.0
        %1064 = vmatpush1.msra.mxu0 0.0
        %1065 = vmatprep.subr.mxu0 0.0
        %1066 = vmatpush1.msra.mxu0 0.0
        %1067 = vmatprep.subr.mxu0 0.0
        %1068 = vmatpush1.msra.mxu0 0.0
        %1069 = vmatprep.subr.mxu0 0.0
        %1070 = vmatpush1.msra.mxu0 0.0
        %1071 = vmatprep.subr.mxu0 0.0
        %1072 = vmatpush1.msra.mxu0 0.0
        %1073 = vmatprep.subr.mxu0 0.0
        %1074 = vmatpush1.msra.mxu0 0.0
        %1075 = vmatprep.subr.mxu0 0.0
        %1076 = vmatpush1.msra.mxu0 0.0
        %1077 = vmatprep.subr.mxu0 0.0
        %1078 = vmatpush1.msra.mxu0 0.0
        %1079 = vmatprep.subr.mxu0 0.0
        %1080 = vmatpush1.msra.mxu0 0.0
        %1081 = vmatprep.subr.mxu0 0.0
        %1082 = vmatpush1.msra.mxu0 0.0
        %1083 = vmatprep.subr.mxu0 0.0
        %1084 = vmatpush1.msra.mxu0 0.0
        %1085 = vmatprep.subr.mxu0 0.0
        %1086 = vmatpush1.msra.mxu0 0.0
        %1087 = vmatprep.subr.mxu0 0.0
        %1088 = vmatpush1.msra.mxu0 0.0
        %1089 = vmatprep.subr.mxu0 0.0
        %1090 = vmatpush1.msra.mxu0 0.0
        %1091 = vmatprep.subr.mxu0 0.0
        %1092 = vmatpush1.msra.mxu0 0.0
        %1093 = vmatprep.subr.mxu0 0.0
        %1094 = vmatpush1.msra.mxu0 0.0
        %1095 = vmatprep.subr.mxu0 0.0
        %1096 = vmatpush1.msra.mxu0 0.0
        %1097 = vmatprep.subr.mxu0 0.0
        %1098 = vmatpush1.msra.mxu0 0.0
        %1099 = vmatprep.subr.mxu0 0.0
        %1100 = vmatpush1.msra.mxu0 0.0
        %1101 = vmatprep.subr.mxu0 0.0
        %1102 = vmatpush1.msra.mxu0 0.0
        %1103 = vmatprep.mubr.f32.mxu0 0.0
        %1104 = vmatmul.mubr.f32.gmra.mrb[0].mxu0 %v1037
        %v1105 = vpop.f32.mrb[0].mxu0
        %v1106 = vadd.f32 0.0, %v1105
        %v1107 = vpop.f32.mrb[0].mxu0
        %1108 = vdwg.mxu0
        %1110 = vrot.lane.b32.xlu0 %v1106, 8
        %v1111 = vpop.permute.xlu0 %1110
        %vm1113 = vcmask 130112
        %1114 = vst.msk [vmem:[#allocation2] sm:$0xff] %vm1113, %v1111
        %1115 = vrot.lane.b32.xlu0 %v613, 112
        %v1116 = vpop.permute.xlu0 %1115
        %1117 = vrot.lane.b32.xlu0 %v691, 112
        %v1118 = vpop.permute.xlu0 %1117
        %v1119 = vsel %vm772, %v1116, 0
        %v1121 = vsel %vm772, %v1118, 0
        %1123 = vmatprep.subr.mxu0 0.0
        %1124 = vmatpush1.xpose.msra.mxu0 %v1121
        %1125 = vmatprep.subr.mxu0 0.0
        %1126 = vmatpush1.xpose.msra.mxu0 0.0
        %1127 = vmatprep.subr.mxu0 0.0
        %1128 = vmatpush1.xpose.msra.mxu0 0.0
        %1129 = vmatprep.subr.mxu0 0.0
        %1130 = vmatpush1.xpose.msra.mxu0 0.0
        %1131 = vmatprep.subr.mxu0 0.0
        %1132 = vmatpush1.xpose.msra.mxu0 0.0
        %1133 = vmatprep.subr.mxu0 0.0
        %1134 = vmatpush1.xpose.msra.mxu0 0.0
        %1135 = vmatprep.subr.mxu0 0.0
        %1136 = vmatpush1.xpose.msra.mxu0 0.0
        %1137 = vmatprep.subr.mxu0 0.0
        %1138 = vmatpush1.xpose.msra.mxu0 0.0
        %1139 = vmatprep.subr.mxu0 0.0
        %1140 = vmatpush1.xpose.msra.mxu0 0.0
        %1141 = vmatprep.subr.mxu0 0.0
        %1142 = vmatpush1.xpose.msra.mxu0 0.0
        %1143 = vmatprep.subr.mxu0 0.0
        %1144 = vmatpush1.xpose.msra.mxu0 0.0
        %1145 = vmatprep.subr.mxu0 0.0
        %1146 = vmatpush1.xpose.msra.mxu0 0.0
        %1147 = vmatprep.subr.mxu0 0.0
        %1148 = vmatpush1.xpose.msra.mxu0 0.0
        %1149 = vmatprep.subr.mxu0 0.0
        %1150 = vmatpush1.xpose.msra.mxu0 0.0
        %1151 = vmatprep.subr.mxu0 0.0
        %1152 = vmatpush1.xpose.msra.mxu0 0.0
        %1153 = vmatprep.subr.mxu0 0.0
        %1154 = vmatpush1.xpose.msra.mxu0 0.0
        %1155 = vmatprep.subr.mxu0 0.0
        %1156 = vmatpush1.xpose.msra.mxu0 0.0
        %1157 = vmatprep.subr.mxu0 0.0
        %1158 = vmatpush1.xpose.msra.mxu0 0.0
        %1159 = vmatprep.subr.mxu0 0.0
        %1160 = vmatpush1.xpose.msra.mxu0 0.0
        %1161 = vmatprep.subr.mxu0 0.0
        %1162 = vmatpush1.xpose.msra.mxu0 0.0
        %1163 = vmatprep.subr.mxu0 0.0
        %1164 = vmatpush1.xpose.msra.mxu0 0.0
        %1165 = vmatprep.subr.mxu0 0.0
        %1166 = vmatpush1.xpose.msra.mxu0 0.0
        %1167 = vmatprep.subr.mxu0 0.0
        %1168 = vmatpush1.xpose.msra.mxu0 0.0
        %1169 = vmatprep.subr.mxu0 0.0
        %1170 = vmatpush1.xpose.msra.mxu0 0.0
        %1171 = vmatprep.subr.mxu0 0.0
        %1172 = vmatpush1.xpose.msra.mxu0 0.0
        %1173 = vmatprep.subr.mxu0 0.0
        %1174 = vmatpush1.xpose.msra.mxu0 0.0
        %1175 = vmatprep.subr.mxu0 0.0
        %1176 = vmatpush1.xpose.msra.mxu0 0.0
        %1177 = vmatprep.subr.mxu0 0.0
        %1178 = vmatpush1.xpose.msra.mxu0 0.0
        %1179 = vmatprep.subr.mxu0 0.0
        %1180 = vmatpush1.xpose.msra.mxu0 0.0
        %1181 = vmatprep.subr.mxu0 0.0
        %1182 = vmatpush1.xpose.msra.mxu0 0.0
        %1183 = vmatprep.subr.mxu0 0.0
        %1184 = vmatpush1.xpose.msra.mxu0 0.0
        %1185 = vmatprep.subr.mxu0 0.0
        %1186 = vmatpush1.xpose.msra.mxu0 0.0
        %1187 = vmatprep.mubr.f32.mxu0 0.0
        %1188 = vmatmul.mubr.f32.gmra.mrb[0].mxu0 %v1119
        %v1189 = vpop.f32.mrb[0].mxu0
        %v1190 = vadd.f32 0.0, %v1189
        %v1191 = vpop.f32.mrb[0].mxu0
        %1192 = vdwg.mxu0
        %s1193 = scalar_lea.vmem %s471, 4 [#allocation9]
        %v1194 = vld [vmem:[%s1193] sm:$0x3]
        %v1195 = vunpack.c.0.s8 %v1194
        %vm1196 = vcmp.eq.s32.totalorder %v1195, 0
        %v1197 = vsel %vm1196, -1e+20, %v1190
        %v1198 = vsel %vm772, %v1197, -inf
        %1199 = vmax.xlane.f32.xlu0 %v1198
        %v1200 = vpop.xlane.xlu0 %1199
        %v1201 = vsub.f32 %v1197, %v1200
        %v1202 = vmul.f32 %v1201, 1.442695
        %v1203 = vpow.pop %v1202
        %v1204 = vsel %vm772, %v1203, 0.0
        %1205 = vadd.xlane.f32.xlu0 %v1204
        %v1206 = vpop.xlane.xlu0 %1205
        %v1207 = vrcp.pop %v1206
        %v1208 = vmul.f32 %v1203, %v1207
        %1209 = vrot.lane.b32.xlu0 %v769, 112
        %v1210 = vpop.permute.xlu0 %1209
        %v1213 = vsel %vm772, %v1208, 0
        %1215 = vmatprep.subr.mxu0 0.0
        %1216 = vmatpush1.msra.mxu0 %v1210
        %1217 = vmatprep.subr.mxu0 0.0
        %1218 = vmatpush1.msra.mxu0 0.0
        %1219 = vmatprep.subr.mxu0 0.0
        %1220 = vmatpush1.msra.mxu0 0.0
        %1221 = vmatprep.subr.mxu0 0.0
        %1222 = vmatpush1.msra.mxu0 0.0
        %1223 = vmatprep.subr.mxu0 0.0
        %1224 = vmatpush1.msra.mxu0 0.0
        %1225 = vmatprep.subr.mxu0 0.0
        %1226 = vmatpush1.msra.mxu0 0.0
        %1227 = vmatprep.subr.mxu0 0.0
        %1228 = vmatpush1.msra.mxu0 0.0
        %1229 = vmatprep.subr.mxu0 0.0
        %1230 = vmatpush1.msra.mxu0 0.0
        %1231 = vmatprep.subr.mxu0 0.0
        %1232 = vmatpush1.msra.mxu0 0.0
        %1233 = vmatprep.subr.mxu0 0.0
        %1234 = vmatpush1.msra.mxu0 0.0
        %1235 = vmatprep.subr.mxu0 0.0
        %1236 = vmatpush1.msra.mxu0 0.0
        %1237 = vmatprep.subr.mxu0 0.0
        %1238 = vmatpush1.msra.mxu0 0.0
        %1239 = vmatprep.subr.mxu0 0.0
        %1240 = vmatpush1.msra.mxu0 0.0
        %1241 = vmatprep.subr.mxu0 0.0
        %1242 = vmatpush1.msra.mxu0 0.0
        %1243 = vmatprep.subr.mxu0 0.0
        %1244 = vmatpush1.msra.mxu0 0.0
        %1245 = vmatprep.subr.mxu0 0.0
        %1246 = vmatpush1.msra.mxu0 0.0
        %1247 = vmatprep.subr.mxu0 0.0
        %1248 = vmatpush1.msra.mxu0 0.0
        %1249 = vmatprep.subr.mxu0 0.0
        %1250 = vmatpush1.msra.mxu0 0.0
        %1251 = vmatprep.subr.mxu0 0.0
        %1252 = vmatpush1.msra.mxu0 0.0
        %1253 = vmatprep.subr.mxu0 0.0
        %1254 = vmatpush1.msra.mxu0 0.0
        %1255 = vmatprep.subr.mxu0 0.0
        %1256 = vmatpush1.msra.mxu0 0.0
        %1257 = vmatprep.subr.mxu0 0.0
        %1258 = vmatpush1.msra.mxu0 0.0
        %1259 = vmatprep.subr.mxu0 0.0
        %1260 = vmatpush1.msra.mxu0 0.0
        %1261 = vmatprep.subr.mxu0 0.0
        %1262 = vmatpush1.msra.mxu0 0.0
        %1263 = vmatprep.subr.mxu0 0.0
        %1264 = vmatpush1.msra.mxu0 0.0
        %1265 = vmatprep.subr.mxu0 0.0
        %1266 = vmatpush1.msra.mxu0 0.0
        %1267 = vmatprep.subr.mxu0 0.0
        %1268 = vmatpush1.msra.mxu0 0.0
        %1269 = vmatprep.subr.mxu0 0.0
        %1270 = vmatpush1.msra.mxu0 0.0
        %1271 = vmatprep.subr.mxu0 0.0
        %1272 = vmatpush1.msra.mxu0 0.0
        %1273 = vmatprep.subr.mxu0 0.0
        %1274 = vmatpush1.msra.mxu0 0.0
        %1275 = vmatprep.subr.mxu0 0.0
        %1276 = vmatpush1.msra.mxu0 0.0
        %1277 = vmatprep.subr.mxu0 0.0
        %1278 = vmatpush1.msra.mxu0 0.0
        %1279 = vmatprep.mubr.f32.mxu0 0.0
        %1280 = vmatmul.mubr.f32.gmra.mrb[0].mxu0 %v1213
        %v1281 = vpop.f32.mrb[0].mxu0
        %v1282 = vadd.f32 0.0, %v1281
        %v1283 = vpop.f32.mrb[0].mxu0
        %1284 = vdwg.mxu0
        %1286 = vrot.lane.b32.xlu0 %v1282, 16
        %v1287 = vpop.permute.xlu0 %1286
        %vm1289 = vcmask 195712
        %1290 = vst.msk [vmem:[#allocation2] sm:$0xff] %vm1289, %v1287
        %1291 = vrot.lane.b32.xlu0 %v613, 104
        %v1292 = vpop.permute.xlu0 %1291
        %1293 = vrot.lane.b32.xlu0 %v691, 104
        %v1294 = vpop.permute.xlu0 %1293
        %v1295 = vsel %vm772, %v1292, 0
        %v1297 = vsel %vm772, %v1294, 0
        %1299 = vmatprep.subr.mxu0 0.0
        %1300 = vmatpush1.xpose.msra.mxu0 %v1297
        %1301 = vmatprep.subr.mxu0 0.0
        %1302 = vmatpush1.xpose.msra.mxu0 0.0
        %1303 = vmatprep.subr.mxu0 0.0
        %1304 = vmatpush1.xpose.msra.mxu0 0.0
        %1305 = vmatprep.subr.mxu0 0.0
        %1306 = vmatpush1.xpose.msra.mxu0 0.0
        %1307 = vmatprep.subr.mxu0 0.0
        %1308 = vmatpush1.xpose.msra.mxu0 0.0
        %1309 = vmatprep.subr.mxu0 0.0
        %1310 = vmatpush1.xpose.msra.mxu0 0.0
        %1311 = vmatprep.subr.mxu0 0.0
        %1312 = vmatpush1.xpose.msra.mxu0 0.0
        %1313 = vmatprep.subr.mxu0 0.0
        %1314 = vmatpush1.xpose.msra.mxu0 0.0
        %1315 = vmatprep.subr.mxu0 0.0
        %1316 = vmatpush1.xpose.msra.mxu0 0.0
        %1317 = vmatprep.subr.mxu0 0.0
        %1318 = vmatpush1.xpose.msra.mxu0 0.0
        %1319 = vmatprep.subr.mxu0 0.0
        %1320 = vmatpush1.xpose.msra.mxu0 0.0
        %1321 = vmatprep.subr.mxu0 0.0
        %1322 = vmatpush1.xpose.msra.mxu0 0.0
        %1323 = vmatprep.subr.mxu0 0.0
        %1324 = vmatpush1.xpose.msra.mxu0 0.0
        %1325 = vmatprep.subr.mxu0 0.0
        %1326 = vmatpush1.xpose.msra.mxu0 0.0
        %1327 = vmatprep.subr.mxu0 0.0
        %1328 = vmatpush1.xpose.msra.mxu0 0.0
        %1329 = vmatprep.subr.mxu0 0.0
        %1330 = vmatpush1.xpose.msra.mxu0 0.0
        %1331 = vmatprep.subr.mxu0 0.0
        %1332 = vmatpush1.xpose.msra.mxu0 0.0
        %1333 = vmatprep.subr.mxu0 0.0
        %1334 = vmatpush1.xpose.msra.mxu0 0.0
        %1335 = vmatprep.subr.mxu0 0.0
        %1336 = vmatpush1.xpose.msra.mxu0 0.0
        %1337 = vmatprep.subr.mxu0 0.0
        %1338 = vmatpush1.xpose.msra.mxu0 0.0
        %1339 = vmatprep.subr.mxu0 0.0
        %1340 = vmatpush1.xpose.msra.mxu0 0.0
        %1341 = vmatprep.subr.mxu0 0.0
        %1342 = vmatpush1.xpose.msra.mxu0 0.0
        %1343 = vmatprep.subr.mxu0 0.0
        %1344 = vmatpush1.xpose.msra.mxu0 0.0
        %1345 = vmatprep.subr.mxu0 0.0
        %1346 = vmatpush1.xpose.msra.mxu0 0.0
        %1347 = vmatprep.subr.mxu0 0.0
        %1348 = vmatpush1.xpose.msra.mxu0 0.0
        %1349 = vmatprep.subr.mxu0 0.0
        %1350 = vmatpush1.xpose.msra.mxu0 0.0
        %1351 = vmatprep.subr.mxu0 0.0
        %1352 = vmatpush1.xpose.msra.mxu0 0.0
        %1353 = vmatprep.subr.mxu0 0.0
        %1354 = vmatpush1.xpose.msra.mxu0 0.0
        %1355 = vmatprep.subr.mxu0 0.0
        %1356 = vmatpush1.xpose.msra.mxu0 0.0
        %1357 = vmatprep.subr.mxu0 0.0
        %1358 = vmatpush1.xpose.msra.mxu0 0.0
        %1359 = vmatprep.subr.mxu0 0.0
        %1360 = vmatpush1.xpose.msra.mxu0 0.0
        %1361 = vmatprep.subr.mxu0 0.0
        %1362 = vmatpush1.xpose.msra.mxu0 0.0
        %1363 = vmatprep.mubr.f32.mxu0 0.0
        %1364 = vmatmul.mubr.f32.gmra.mrb[0].mxu0 %v1295
        %v1365 = vpop.f32.mrb[0].mxu0
        %v1366 = vadd.f32 0.0, %v1365
        %v1367 = vpop.f32.mrb[0].mxu0
        %1368 = vdwg.mxu0
        %s1369 = scalar_lea.vmem %s471, 6 [#allocation9]
        %v1370 = vld [vmem:[%s1369] sm:$0x3]
        %v1371 = vunpack.c.0.s8 %v1370
        %vm1372 = vcmp.eq.s32.totalorder %v1371, 0
        %v1373 = vsel %vm1372, -1e+20, %v1366
        %v1374 = vsel %vm772, %v1373, -inf
        %1375 = vmax.xlane.f32.xlu0 %v1374
        %v1376 = vpop.xlane.xlu0 %1375
        %v1377 = vsub.f32 %v1373, %v1376
        %v1378 = vmul.f32 %v1377, 1.442695
        %v1379 = vpow.pop %v1378
        %v1380 = vsel %vm772, %v1379, 0.0
        %1381 = vadd.xlane.f32.xlu0 %v1380
        %v1382 = vpop.xlane.xlu0 %1381
        %v1383 = vrcp.pop %v1382
        %v1384 = vmul.f32 %v1379, %v1383
        %1385 = vrot.lane.b32.xlu0 %v769, 104
        %v1386 = vpop.permute.xlu0 %1385
        %v1389 = vsel %vm772, %v1384, 0
        %1391 = vmatprep.subr.mxu0 0.0
        %1392 = vmatpush1.msra.mxu0 %v1386
        %1393 = vmatprep.subr.mxu0 0.0
        %1394 = vmatpush1.msra.mxu0 0.0
        %1395 = vmatprep.subr.mxu0 0.0
        %1396 = vmatpush1.msra.mxu0 0.0
        %1397 = vmatprep.subr.mxu0 0.0
        %1398 = vmatpush1.msra.mxu0 0.0
        %1399 = vmatprep.subr.mxu0 0.0
        %1400 = vmatpush1.msra.mxu0 0.0
        %1401 = vmatprep.subr.mxu0 0.0
        %1402 = vmatpush1.msra.mxu0 0.0
        %1403 = vmatprep.subr.mxu0 0.0
        %1404 = vmatpush1.msra.mxu0 0.0
        %1405 = vmatprep.subr.mxu0 0.0
        %1406 = vmatpush1.msra.mxu0 0.0
        %1407 = vmatprep.subr.mxu0 0.0
        %1408 = vmatpush1.msra.mxu0 0.0
        %1409 = vmatprep.subr.mxu0 0.0
        %1410 = vmatpush1.msra.mxu0 0.0
        %1411 = vmatprep.subr.mxu0 0.0
        %1412 = vmatpush1.msra.mxu0 0.0
        %1413 = vmatprep.subr.mxu0 0.0
        %1414 = vmatpush1.msra.mxu0 0.0
        %1415 = vmatprep.subr.mxu0 0.0
        %1416 = vmatpush1.msra.mxu0 0.0
        %1417 = vmatprep.subr.mxu0 0.0
        %1418 = vmatpush1.msra.mxu0 0.0
        %1419 = vmatprep.subr.mxu0 0.0
        %1420 = vmatpush1.msra.mxu0 0.0
        %1421 = vmatprep.subr.mxu0 0.0
        %1422 = vmatpush1.msra.mxu0 0.0
        %1423 = vmatprep.subr.mxu0 0.0
        %1424 = vmatpush1.msra.mxu0 0.0
        %1425 = vmatprep.subr.mxu0 0.0
        %1426 = vmatpush1.msra.mxu0 0.0
        %1427 = vmatprep.subr.mxu0 0.0
        %1428 = vmatpush1.msra.mxu0 0.0
        %1429 = vmatprep.subr.mxu0 0.0
        %1430 = vmatpush1.msra.mxu0 0.0
        %1431 = vmatprep.subr.mxu0 0.0
        %1432 = vmatpush1.msra.mxu0 0.0
        %1433 = vmatprep.subr.mxu0 0.0
        %1434 = vmatpush1.msra.mxu0 0.0
        %1435 = vmatprep.subr.mxu0 0.0
        %1436 = vmatpush1.msra.mxu0 0.0
        %1437 = vmatprep.subr.mxu0 0.0
        %1438 = vmatpush1.msra.mxu0 0.0
        %1439 = vmatprep.subr.mxu0 0.0
        %1440 = vmatpush1.msra.mxu0 0.0
        %1441 = vmatprep.subr.mxu0 0.0
        %1442 = vmatpush1.msra.mxu0 0.0
        %1443 = vmatprep.subr.mxu0 0.0
        %1444 = vmatpush1.msra.mxu0 0.0
        %1445 = vmatprep.subr.mxu0 0.0
        %1446 = vmatpush1.msra.mxu0 0.0
        %1447 = vmatprep.subr.mxu0 0.0
        %1448 = vmatpush1.msra.mxu0 0.0
        %1449 = vmatprep.subr.mxu0 0.0
        %1450 = vmatpush1.msra.mxu0 0.0
        %1451 = vmatprep.subr.mxu0 0.0
        %1452 = vmatpush1.msra.mxu0 0.0
        %1453 = vmatprep.subr.mxu0 0.0
        %1454 = vmatpush1.msra.mxu0 0.0
        %1455 = vmatprep.mubr.f32.mxu0 0.0
        %1456 = vmatmul.mubr.f32.gmra.mrb[0].mxu0 %v1389
        %v1457 = vpop.f32.mrb[0].mxu0
        %v1458 = vadd.f32 0.0, %v1457
        %v1459 = vpop.f32.mrb[0].mxu0
        %1460 = vdwg.mxu0
        %1462 = vrot.lane.b32.xlu0 %v1458, 24
        %v1463 = vpop.permute.xlu0 %1462
        %vm1465 = vcmask 261312
        %1466 = vst.msk [vmem:[#allocation2] sm:$0xff] %vm1465, %v1463
        %v1467 = vld [vmem:[#allocation2] sm:$0xff]
        %v1468 = vld [vmem:[#allocation15] sm:$0xff]
        %v1469 = vld [vmem:[#allocation15 + $0x8] sm:$0xff]
        %v1470 = vld [vmem:[#allocation15 + $0x10] sm:$0xff]
        %v1471 = vld [vmem:[#allocation15 + $0x18] sm:$0xff]
        %v1472 = vld [vmem:[%s8] sm:$0x1]
        %v1474 = vlaneseq
        %v1475 = vshrl.u32 %v1474, 7
        %v1476 = vsub.s32 0, %v1475
        %v1477 = vrot.slane %v1472, %v1476
        %v1480 = vsel %vm542, %v1467, 0
        %1482 = vmatprep.subr.mxu0 0.0
        %1483 = vmatpush1.msra.mxu0 %v1468
        %1484 = vmatprep.subr.mxu0 0.0
        %1485 = vmatpush1.msra.mxu0 %v1469
        %1486 = vmatprep.subr.mxu0 0.0
        %1487 = vmatpush1.msra.mxu0 %v1470
        %1488 = vmatprep.subr.mxu0 0.0
        %1489 = vmatpush1.msra.mxu0 %v1471
        %1490 = vmatprep.subr.mxu0 0.0
        %1491 = vmatpush1.msra.mxu0 0.0
        %1492 = vmatprep.subr.mxu0 0.0
        %1493 = vmatpush1.msra.mxu0 0.0
        %1494 = vmatprep.subr.mxu0 0.0
        %1495 = vmatpush1.msra.mxu0 0.0
        %1496 = vmatprep.subr.mxu0 0.0
        %1497 = vmatpush1.msra.mxu0 0.0
        %1498 = vmatprep.subr.mxu0 0.0
        %1499 = vmatpush1.msra.mxu0 0.0
        %1500 = vmatprep.subr.mxu0 0.0
        %1501 = vmatpush1.msra.mxu0 0.0
        %1502 = vmatprep.subr.mxu0 0.0
        %1503 = vmatpush1.msra.mxu0 0.0
        %1504 = vmatprep.subr.mxu0 0.0
        %1505 = vmatpush1.msra.mxu0 0.0
        %1506 = vmatprep.subr.mxu0 0.0
        %1507 = vmatpush1.msra.mxu0 0.0
        %1508 = vmatprep.subr.mxu0 0.0
        %1509 = vmatpush1.msra.mxu0 0.0
        %1510 = vmatprep.subr.mxu0 0.0
        %1511 = vmatpush1.msra.mxu0 0.0
        %1512 = vmatprep.subr.mxu0 0.0
        %1513 = vmatpush1.msra.mxu0 0.0
        %1514 = vmatprep.subr.mxu0 0.0
        %1515 = vmatpush1.msra.mxu0 0.0
        %1516 = vmatprep.subr.mxu0 0.0
        %1517 = vmatpush1.msra.mxu0 0.0
        %1518 = vmatprep.subr.mxu0 0.0
        %1519 = vmatpush1.msra.mxu0 0.0
        %1520 = vmatprep.subr.mxu0 0.0
        %1521 = vmatpush1.msra.mxu0 0.0
        %1522 = vmatprep.subr.mxu0 0.0
        %1523 = vmatpush1.msra.mxu0 0.0
        %1524 = vmatprep.subr.mxu0 0.0
        %1525 = vmatpush1.msra.mxu0 0.0
        %1526 = vmatprep.subr.mxu0 0.0
        %1527 = vmatpush1.msra.mxu0 0.0
        %1528 = vmatprep.subr.mxu0 0.0
        %1529 = vmatpush1.msra.mxu0 0.0
        %1530 = vmatprep.subr.mxu0 0.0
        %1531 = vmatpush1.msra.mxu0 0.0
        %1532 = vmatprep.subr.mxu0 0.0
        %1533 = vmatpush1.msra.mxu0 0.0
        %1534 = vmatprep.subr.mxu0 0.0
        %1535 = vmatpush1.msra.mxu0 0.0
        %1536 = vmatprep.subr.mxu0 0.0
        %1537 = vmatpush1.msra.mxu0 0.0
        %1538 = vmatprep.subr.mxu0 0.0
        %1539 = vmatpush1.msra.mxu0 0.0
        %1540 = vmatprep.subr.mxu0 0.0
        %1541 = vmatpush1.msra.mxu0 0.0
        %1542 = vmatprep.subr.mxu0 0.0
        %1543 = vmatpush1.msra.mxu0 0.0
        %1544 = vmatprep.subr.mxu0 0.0
        %1545 = vmatpush1.msra.mxu0 0.0
        %1546 = vmatprep.mubr.f32.mxu0 0.0
        %1547 = vmatmul.mubr.f32.gmra.mrb[0].mxu0 %v1480
        %v1548 = vpop.f32.mrb[0].mxu0
        %v1549 = vadd.f32 %v1477, %v1548
        %v1550 = vpop.f32.mrb[0].mxu0
        %1551 = vdwg.mxu0
        %1552 = vst.msk [vmem:[%s536] sm:$0xff] %vm542, %v1549
        %s1553 = sand.u32 %s269, 1
        %s1554 = scalar_lea.sflag [#allocation5], %s1553
        %s1555 = sand.u32 %s269, 1
        %s1556 = smul.addr %s1555, 8
        %s1557 = scalar_lea.vmem [#allocation17], %s1556
        // Predicated region
        $region89: #{tpu_custom_call.1} parent=55 // pred_check
          %p1558 = pneg %p279
        $region90: #{tpu_custom_call.1} parent=55 // pred_check_branch
          %1560 = sbr.rel (%p1558) target = $region92
        $region91: #{tpu_custom_call.1} parent=55 // pred_region
          %s1562 = ssub.s32 128, 128
          %1563 = vsyncadd %s1554, %s1562
          %s1564 = sadd.s32 %s39, %s38
          %s1565 = smul.addr %s1564, 128
          %s1566 = scalar_lea.hbm %s9, %s1565
          %s1568 = sshll.u32 %s1557, 4
          %s1569 = int_to_ptr.vmem [resolvable:$true] %s1568
          %1571 = dma.vmem_to_hbm [thread:$0]  %s1569, 128, %s1566, %s1554
        $region92: #{tpu_custom_call.1} parent=55 // pred_fallthru
          _
      $region56: #{tpu_custom_call.1} parent=5 // pred_fallthru
        _
      %p1572 = scmp.le.s32.totalorder 2, %s29
      // Predicated region
      $region93: #{tpu_custom_call.1} parent=5 // pred_check
        %p1573 = pneg %p1572
      $region94: #{tpu_custom_call.1} parent=5 // pred_check_branch
        %1575 = sbr.rel (%p1573) target = $region96
      $region95: #{tpu_custom_call.1} parent=5 // pred_region
        %s1576 = ssub.s32 %s29, 2
        // Predicated region
        $region97: #{tpu_custom_call.1} parent=95 // pred_check
          %p1577 = pneg %p285
        $region98: #{tpu_custom_call.1} parent=95 // pred_check_branch
          %1579 = sbr.rel (%p1577) target = $region100
        $region99: #{tpu_custom_call.1} parent=95 // pred_region
          %s1580 = sand.u32 %s270, 1
          %s1581 = scalar_lea.sflag [#allocation5], %s1580
          %s1582 = sand.u32 %s270, 1
          %s1583 = smul.addr %s1582, 8
          %s1584 = scalar_lea.vmem [#allocation17], %s1583
          %1585 = dma.done %s1581, 128
        $region100: #{tpu_custom_call.1} parent=95 // pred_fallthru
          _
      $region96: #{tpu_custom_call.1} parent=5 // pred_fallthru
        _
    $region6: #{tpu_custom_call.1} parent=1 // loop_footer
      %s33 = sadd.s32 1, %s29
    $region7: #{tpu_custom_call.1} parent=1 // loop_footer_branch
      %28 = sbr.rel target = $region3
    $region8: #{tpu_custom_call.1} parent=1 // loop_exit
      _
    %1586 = vsyncpa [#allocation4], 1
    %s1587 = scalar_lea.sflag [#allocation4], 1
    %1588 = vsyncpa %s1587, 1
    %1589 = vsyncpa [#allocation7], 1
    %s1590 = scalar_lea.sflag [#allocation7], 1
    %1591 = vsyncpa %s1590, 1
    %1592 = vsyncpa [#allocation10], 1
    %s1593 = scalar_lea.sflag [#allocation10], 1
    %1594 = vsyncpa %s1593, 1
    %1595 = vsyncpa [#allocation13], 1
    %1596 = vsyncpa [#allocation16], 1
    %1597 = vsyncpa [#allocation5], 1
    %s1598 = scalar_lea.sflag [#allocation5], 1
    %1599 = vsyncpa %s1598, 1

</llo_original>
